<compile_context>
chip_gen: v7x
topology: tpu7x:2x2x1
jax: 0.10.0
libtpu: 0.0.40
codegen_flags: <defaults>
</compile_context>

<pallas_src>
import jax
import jax.numpy as jnp
from jax.experimental import pallas as pl
from jax.experimental.pallas import tpu as pltpu  # noqa: F401  (kept for TPU-specific extensions)

# ---------------- configuration (small, consistent with the module) ----------
NDIM = 3          # ndim in the PyTorch script
N0 = 32           # args.N0 (resnet50 layer4 feature dim, shrunk for test)
N1 = 32           # args.N1
N2 = 32           # args.N2
B, C, H, W = 2, 4, 16, 16   # batch, channels, spatial

LANE = 128
N0P = max(LANE, ((N0 + LANE - 1) // LANE) * LANE)    # 128
N1P = max(LANE, ((N1 + LANE - 1) // LANE) * LANE)    # 128
N2P = max(LANE, ((N2 + LANE - 1) // LANE) * LANE)    # 128
NDP = max(LANE, ((NDIM + LANE - 1) // LANE) * LANE)  # 128 (sliced to 3 in wrapper)


# ---------------- fused kernel: feature model + pose model + pi*tanh ---------
def fused_kernel(x_ref, w0_ref, b0_ref, w1_ref, b1_ref, w2_ref, b2_ref,
                 w3_ref, b3_ref, o_ref):
    # x_ref:  (B, H*W, C)   pixels on sublanes, channels (tiny) on lanes
    # w0_ref: (C, N0P), b0_ref: (1, N0P)
    # w1/w2/w3: (N0P, N1P)/(N1P, N2P)/(N2P, NDP), biases (1, *)
    # o_ref:  (B, NDP)  lane-dense output, sliced to NDIM in the wrapper
    b, hw, c = x_ref.shape
    n0p = w0_ref.shape[1]

    x = x_ref[...]
    w0 = w0_ref[...]

    # ---- 1x1 conv over C channels: C is tiny (4), so use unrolled VPU
    # broadcast-multiply-adds instead of a K=4 MXU contraction.
    acc = jnp.zeros((b, hw, n0p), jnp.float32)
    for ci in range(c):
        acc = acc + x[:, :, ci:ci + 1] * w0[ci:ci + 1, :]
    feat = jnp.maximum(acc + b0_ref[...], 0.0)          # conv + ReLU, (B, HW, N0P)

    pooled = jnp.mean(feat, axis=1)                     # global avg pool -> (B, N0P)

    # ---- pose model (3-layer MLP), hidden dims lane-padded to 128
    h1 = jnp.dot(pooled, w1_ref[...], preferred_element_type=jnp.float32)
    h1 = jnp.maximum(h1 + b1_ref[...], 0.0)             # fc1 + ReLU
    h2 = jnp.dot(h1, w2_ref[...], preferred_element_type=jnp.float32)
    h2 = jnp.maximum(h2 + b2_ref[...], 0.0)             # fc2 + ReLU
    y = jnp.dot(h2, w3_ref[...], preferred_element_type=jnp.float32) + b3_ref[...]

    o_ref[...] = (jnp.pi * jnp.tanh(y)).astype(o_ref.dtype)   # pi * tanh


def _full_spec(shape):
    # whole-array block (shapes are tiny; single grid step, no tiling needed)
    return pl.BlockSpec(shape, lambda: tuple(0 for _ in shape))


def _pad2(a, rows, cols):
    return jnp.pad(a, ((0, rows - a.shape[0]), (0, cols - a.shape[1])))


def independent_model_forward(x_nchw, params):
    """x_nchw: (B, C, H, W) float32 -> (B, NDIM) float32."""
    b_, c_, h_, w_ = x_nchw.shape
    # NCHW -> (B, H*W, C): one fused XLA transpose+reshape, no in-kernel reshapes.
    x = jnp.transpose(x_nchw, (0, 2, 3, 1)).reshape(b_, h_ * w_, c_)

    # Zero-pad lane (last) dims to 128 so every operand/store is lane-dense.
    # Padding with zeros is exact: padded feature/hidden columns stay 0 through
    # conv/ReLU/mean/matmuls, and padded output columns are dropped below.
    w0 = _pad2(params["w0"], c_, N0P); b0 = _pad2(params["b0"], 1, N0P)
    w1 = _pad2(params["w1"], N0P, N1P); b1 = _pad2(params["b1"], 1, N1P)
    w2 = _pad2(params["w2"], N1P, N2P); b2 = _pad2(params["b2"], 1, N2P)
    w3 = _pad2(params["w3"], N2P, NDP); b3 = _pad2(params["b3"], 1, NDP)

    args = (x, w0, b0, w1, b1, w2, b2, w3, b3)
    out_pad = pl.pallas_call(
        fused_kernel,
        out_shape=jax.ShapeDtypeStruct((b_, NDP), jnp.float32),
        in_specs=[_full_spec(a.shape) for a in args],
        out_specs=_full_spec((b_, NDP)),
    )(*args)
    return out_pad[:, :NDIM]


def init_params(key):
    ks = jax.random.split(key, 8)
    scale = 0.1
    return {
        # feature model (pointwise conv weights), layout (in, out)
        "w0": scale * jax.random.normal(ks[0], (C, N0), jnp.float32),
        "b0": scale * jax.random.normal(ks[1], (1, N0), jnp.float32),
        # pose model: model_3layer(N0, N1, N2, ndim), layout (in, out)
        # (PyTorch nn.Linear weights are (out, in): transpose when importing.)
        "w1": scale * jax.random.normal(ks[2], (N0, N1), jnp.float32),
        "b1": scale * jax.random.normal(ks[3], (1, N1), jnp.float32),
        "w2": scale * jax.random.normal(ks[4], (N1, N2), jnp.float32),
        "b2": scale * jax.random.normal(ks[5], (1, N2), jnp.float32),
        "w3": scale * jax.random.normal(ks[6], (N2, NDIM), jnp.float32),
        "b3": scale * jax.random.normal(ks[7], (1, NDIM), jnp.float32),
    }


if __name__ == "__main__":
    key = jax.random.PRNGKey(0)
    k_x, k_p = jax.random.split(key)
    x = jax.random.normal(k_x, (B, C, H, W), jnp.float32)   # PyTorch-style NCHW input
    params = init_params(k_p)

    forward = jax.jit(independent_model_forward)
    out = forward(x, params)
    out = jax.block_until_ready(out)

    assert out.shape == (B, NDIM), out.shape
    assert bool(jnp.all(jnp.abs(out) <= jnp.pi)), "pi*tanh range violated"
    print("KERNEL_OK")
</pallas_src>

<mosaic_0001>
module attributes {stable_mosaic.version = 11 : i64} {
  func.func @fused_kernel(%arg0: memref<2x256x4xf32, #tpu.memory_space<vmem>>, %arg1: memref<4x128xf32, #tpu.memory_space<vmem>>, %arg2: memref<1x128xf32, #tpu.memory_space<vmem>>, %arg3: memref<128x128xf32, #tpu.memory_space<vmem>>, %arg4: memref<1x128xf32, #tpu.memory_space<vmem>>, %arg5: memref<128x128xf32, #tpu.memory_space<vmem>>, %arg6: memref<1x128xf32, #tpu.memory_space<vmem>>, %arg7: memref<128x128xf32, #tpu.memory_space<vmem>>, %arg8: memref<1x128xf32, #tpu.memory_space<vmem>>, %arg9: memref<2x128xf32, #tpu.memory_space<vmem>>) attributes {dimension_semantics = [], scalar_prefetch = 0 : i64, scratch_operands = 0 : i64, tpu.core_type = #tpu.core_type<tc>} {
    %c0 = arith.constant 0 : index
    %c0_0 = arith.constant 0 : index
    %c0_1 = arith.constant 0 : index
    %0 = vector.load %arg0[%c0, %c0_0, %c0_1] : memref<2x256x4xf32, #tpu.memory_space<vmem>>, vector<2x256x4xf32>
    %c0_2 = arith.constant 0 : index
    %c0_3 = arith.constant 0 : index
    %1 = vector.load %arg1[%c0_2, %c0_3] : memref<4x128xf32, #tpu.memory_space<vmem>>, vector<4x128xf32>
    %cst = arith.constant 0.000000e+00 : f32
    %2 = vector.broadcast %cst : f32 to vector<2x256x128xf32>
    %3 = vector.extract_strided_slice %0 {offsets = [0, 0, 0], sizes = [2, 256, 1], strides = [1, 1, 1]} : vector<2x256x4xf32> to vector<2x256x1xf32>
    %4 = vector.extract_strided_slice %1 {offsets = [0, 0], sizes = [1, 128], strides = [1, 1]} : vector<4x128xf32> to vector<1x128xf32>
    %5 = vector.shape_cast %4 : vector<1x128xf32> to vector<1x1x128xf32>
    %6 = vector.broadcast %3 : vector<2x256x1xf32> to vector<2x256x128xf32>
    %7 = vector.broadcast %5 : vector<1x1x128xf32> to vector<2x256x128xf32>
    %8 = arith.mulf %6, %7 : vector<2x256x128xf32>
    %9 = arith.addf %2, %8 : vector<2x256x128xf32>
    %10 = vector.extract_strided_slice %0 {offsets = [0, 0, 1], sizes = [2, 256, 1], strides = [1, 1, 1]} : vector<2x256x4xf32> to vector<2x256x1xf32>
    %11 = vector.extract_strided_slice %1 {offsets = [1, 0], sizes = [1, 128], strides = [1, 1]} : vector<4x128xf32> to vector<1x128xf32>
    %12 = vector.shape_cast %11 : vector<1x128xf32> to vector<1x1x128xf32>
    %13 = vector.broadcast %10 : vector<2x256x1xf32> to vector<2x256x128xf32>
    %14 = vector.broadcast %12 : vector<1x1x128xf32> to vector<2x256x128xf32>
    %15 = arith.mulf %13, %14 : vector<2x256x128xf32>
    %16 = arith.addf %9, %15 : vector<2x256x128xf32>
    %17 = vector.extract_strided_slice %0 {offsets = [0, 0, 2], sizes = [2, 256, 1], strides = [1, 1, 1]} : vector<2x256x4xf32> to vector<2x256x1xf32>
    %18 = vector.extract_strided_slice %1 {offsets = [2, 0], sizes = [1, 128], strides = [1, 1]} : vector<4x128xf32> to vector<1x128xf32>
    %19 = vector.shape_cast %18 : vector<1x128xf32> to vector<1x1x128xf32>
    %20 = vector.broadcast %17 : vector<2x256x1xf32> to vector<2x256x128xf32>
    %21 = vector.broadcast %19 : vector<1x1x128xf32> to vector<2x256x128xf32>
    %22 = arith.mulf %20, %21 : vector<2x256x128xf32>
    %23 = arith.addf %16, %22 : vector<2x256x128xf32>
    %24 = vector.extract_strided_slice %0 {offsets = [0, 0, 3], sizes = [2, 256, 1], strides = [1, 1, 1]} : vector<2x256x4xf32> to vector<2x256x1xf32>
    %25 = vector.extract_strided_slice %1 {offsets = [3, 0], sizes = [1, 128], strides = [1, 1]} : vector<4x128xf32> to vector<1x128xf32>
    %26 = vector.shape_cast %25 : vector<1x128xf32> to vector<1x1x128xf32>
    %27 = vector.broadcast %24 : vector<2x256x1xf32> to vector<2x256x128xf32>
    %28 = vector.broadcast %26 : vector<1x1x128xf32> to vector<2x256x128xf32>
    %29 = arith.mulf %27, %28 : vector<2x256x128xf32>
    %30 = arith.addf %23, %29 : vector<2x256x128xf32>
    %c0_4 = arith.constant 0 : index
    %c0_5 = arith.constant 0 : index
    %31 = vector.load %arg2[%c0_4, %c0_5] : memref<1x128xf32, #tpu.memory_space<vmem>>, vector<1x128xf32>
    %32 = vector.shape_cast %31 : vector<1x128xf32> to vector<1x1x128xf32>
    %33 = vector.broadcast %32 : vector<1x1x128xf32> to vector<2x256x128xf32>
    %34 = arith.addf %30, %33 : vector<2x256x128xf32>
    %cst_6 = arith.constant 0.000000e+00 : f32
    %35 = vector.broadcast %cst_6 : f32 to vector<2x256x128xf32>
    %36 = arith.maximumf %34, %35 : vector<2x256x128xf32>
    %cst_7 = arith.constant dense<0.000000e+00> : vector<2x128xf32>
    %37 = vector.multi_reduction <add>, %36, %cst_7 [1] : vector<2x256x128xf32> to vector<2x128xf32>
    %cst_8 = arith.constant 2.560000e+02 : f32
    %38 = vector.broadcast %cst_8 : f32 to vector<2x128xf32>
    %39 = arith.divf %37, %38 : vector<2x128xf32>
    %c0_9 = arith.constant 0 : index
    %c0_10 = arith.constant 0 : index
    %40 = vector.load %arg3[%c0_9, %c0_10] : memref<128x128xf32, #tpu.memory_space<vmem>>, vector<128x128xf32>
    %cst_11 = arith.constant dense<0.000000e+00> : vector<2x128xf32>
    %41 = tpu.matmul %39, %40, %cst_11 {dimension_numbers = #tpu.dot_dimension_numbers<[1], [0], [0], [1], [0, 0, 1, 1], [], []>} : vector<2x128xf32>, vector<128x128xf32>, vector<2x128xf32> -> vector<2x128xf32>
    %c0_12 = arith.constant 0 : index
    %c0_13 = arith.constant 0 : index
    %42 = vector.load %arg4[%c0_12, %c0_13] : memref<1x128xf32, #tpu.memory_space<vmem>>, vector<1x128xf32>
    %43 = vector.broadcast %42 : vector<1x128xf32> to vector<2x128xf32>
    %44 = arith.addf %41, %43 : vector<2x128xf32>
    %cst_14 = arith.constant 0.000000e+00 : f32
    %45 = vector.broadcast %cst_14 : f32 to vector<2x128xf32>
    %46 = arith.maximumf %44, %45 : vector<2x128xf32>
    %c0_15 = arith.constant 0 : index
    %c0_16 = arith.constant 0 : index
    %47 = vector.load %arg5[%c0_15, %c0_16] : memref<128x128xf32, #tpu.memory_space<vmem>>, vector<128x128xf32>
    %cst_17 = arith.constant dense<0.000000e+00> : vector<2x128xf32>
    %48 = tpu.matmul %46, %47, %cst_17 {dimension_numbers = #tpu.dot_dimension_numbers<[1], [0], [0], [1], [0, 0, 1, 1], [], []>} : vector<2x128xf32>, vector<128x128xf32>, vector<2x128xf32> -> vector<2x128xf32>
    %c0_18 = arith.constant 0 : index
    %c0_19 = arith.constant 0 : index
    %49 = vector.load %arg6[%c0_18, %c0_19] : memref<1x128xf32, #tpu.memory_space<vmem>>, vector<1x128xf32>
    %50 = vector.broadcast %49 : vector<1x128xf32> to vector<2x128xf32>
    %51 = arith.addf %48, %50 : vector<2x128xf32>
    %cst_20 = arith.constant 0.000000e+00 : f32
    %52 = vector.broadcast %cst_20 : f32 to vector<2x128xf32>
    %53 = arith.maximumf %51, %52 : vector<2x128xf32>
    %c0_21 = arith.constant 0 : index
    %c0_22 = arith.constant 0 : index
    %54 = vector.load %arg7[%c0_21, %c0_22] : memref<128x128xf32, #tpu.memory_space<vmem>>, vector<128x128xf32>
    %cst_23 = arith.constant dense<0.000000e+00> : vector<2x128xf32>
    %55 = tpu.matmul %53, %54, %cst_23 {dimension_numbers = #tpu.dot_dimension_numbers<[1], [0], [0], [1], [0, 0, 1, 1], [], []>} : vector<2x128xf32>, vector<128x128xf32>, vector<2x128xf32> -> vector<2x128xf32>
    %c0_24 = arith.constant 0 : index
    %c0_25 = arith.constant 0 : index
    %56 = vector.load %arg8[%c0_24, %c0_25] : memref<1x128xf32, #tpu.memory_space<vmem>>, vector<1x128xf32>
    %57 = vector.broadcast %56 : vector<1x128xf32> to vector<2x128xf32>
    %58 = arith.addf %55, %57 : vector<2x128xf32>
    %59 = math.tanh %58 : vector<2x128xf32>
    %cst_26 = arith.constant 3.14159274 : f32
    %60 = vector.broadcast %cst_26 : f32 to vector<2x128xf32>
    %61 = arith.mulf %60, %59 : vector<2x128xf32>
    %c0_27 = arith.constant 0 : index
    %c0_28 = arith.constant 0 : index
    %62 = vector.load %arg9[%c0_27, %c0_28] : memref<2x128xf32, #tpu.memory_space<vmem>>, vector<2x128xf32>
    tpu.vector_store %arg9[%c0_27, %c0_28], %61 {strides = array<i32>} : memref<2x128xf32, #tpu.memory_space<vmem>>, vector<2x128xf32>,
    return
  }
}

</mosaic_0001>

<llo_original>
// kernel: independent_model_forward.1
$region0: #{independent_model_forward.1}
  #allocation0 [shape = 'u32[]', space=smem, size = 0x4, offset = 0x4, fixed_abs, tag = 'smem constant byte address 0x4 - core index']
  #allocation1 [shape = 'u32[144,128]{1,0:T(1,128)}', space=vmem, size = 0x12000, scoped, tag = 'internal scratch']
  %s0 = inlined_call_operand.vmem [shape: f32[2,256,4], index: 0, kind: input, shape index: {}]
  %s1 = inlined_call_operand.vmem [shape: f32[4,128], index: 1, kind: input, shape index: {}]
  %s2 = inlined_call_operand.vmem [shape: f32[1,128], index: 2, kind: input, shape index: {}]
  %s3 = inlined_call_operand.vmem [shape: f32[128,128], index: 3, kind: input, shape index: {}]
  %s4 = inlined_call_operand.vmem [shape: f32[1,128], index: 4, kind: input, shape index: {}]
  %s5 = inlined_call_operand.vmem [shape: f32[128,128], index: 5, kind: input, shape index: {}]
  %s6 = inlined_call_operand.vmem [shape: f32[1,128], index: 6, kind: input, shape index: {}]
  %s7 = inlined_call_operand.vmem [shape: f32[128,128], index: 7, kind: input, shape index: {}]
  %s8 = inlined_call_operand.vmem [shape: f32[1,128], index: 8, kind: input, shape index: {}]
  %s9 = inlined_call_operand.hbm [shape: f32[2,128], index: 9, kind: output, shape index: {}]
  %s10 = sld [smem:[#allocation0]]
  $region46: #{independent_model_forward.1} parent=0
    _
  %s12 = ssub.s32 1, %s10
  %s13 = scalar_select 0, %s12, %s10
  $region1: #{independent_model_forward.1} parent=0
    #allocation2 [shape = 'u8[1024]{0}', space=vmem, size = 0x400, scoped, tag = 'output window, operand 0, single buffered']
    #allocation3 [shape = 's32[1]{0}', space=sflag, size = 0x4, scoped, tag = 'scoped memory for independent_model_forward.1']
    %14 = vsyncpa [#allocation3], 0
    // Predicated region
    $region2: #{independent_model_forward.1} parent=1 // pred_check
      _
    $region3: #{independent_model_forward.1} parent=1 // pred_check_branch
      %16 = sbr.rel (0) target = $region5
    $region4: #{independent_model_forward.1} parent=1 // pred_region
      _
    $region5: #{independent_model_forward.1} parent=1 // pred_fallthru
      _
    // Predicated region
    $region6: #{independent_model_forward.1} parent=1 // pred_check
      _
    $region7: #{independent_model_forward.1} parent=1 // pred_check_branch
      %18 = sbr.rel (0) target = $region9
    $region8: #{independent_model_forward.1} parent=1 // pred_region
      _
    $region9: #{independent_model_forward.1} parent=1 // pred_fallthru
      _
    // Predicated region
    $region10: #{independent_model_forward.1} parent=1 // pred_check
      _
    $region11: #{independent_model_forward.1} parent=1 // pred_check_branch
      %20 = sbr.rel (0) target = $region13
    $region12: #{independent_model_forward.1} parent=1 // pred_region
      _
    $region13: #{independent_model_forward.1} parent=1 // pred_fallthru
      _
    // Predicated region
    $region14: #{independent_model_forward.1} parent=1 // pred_check
      _
    $region15: #{independent_model_forward.1} parent=1 // pred_check_branch
      %22 = sbr.rel (0) target = $region17
    $region16: #{independent_model_forward.1} parent=1 // pred_region
      _
    $region17: #{independent_model_forward.1} parent=1 // pred_fallthru
      _
    // Predicated region
    $region18: #{independent_model_forward.1} parent=1 // pred_check
      _
    $region19: #{independent_model_forward.1} parent=1 // pred_check_branch
      %24 = sbr.rel (0) target = $region21
    $region20: #{independent_model_forward.1} parent=1 // pred_region
      _
    $region21: #{independent_model_forward.1} parent=1 // pred_fallthru
      _
    // Predicated region
    $region22: #{independent_model_forward.1} parent=1 // pred_check
      _
    $region23: #{independent_model_forward.1} parent=1 // pred_check_branch
      %26 = sbr.rel (0) target = $region25
    $region24: #{independent_model_forward.1} parent=1 // pred_region
      _
    $region25: #{independent_model_forward.1} parent=1 // pred_fallthru
      _
    // Predicated region
    $region26: #{independent_model_forward.1} parent=1 // pred_check
      _
    $region27: #{independent_model_forward.1} parent=1 // pred_check_branch
      %28 = sbr.rel (0) target = $region29
    $region28: #{independent_model_forward.1} parent=1 // pred_region
      _
    $region29: #{independent_model_forward.1} parent=1 // pred_fallthru
      _
    // Predicated region
    $region30: #{independent_model_forward.1} parent=1 // pred_check
      _
    $region31: #{independent_model_forward.1} parent=1 // pred_check_branch
      %30 = sbr.rel (0) target = $region33
    $region32: #{independent_model_forward.1} parent=1 // pred_region
      _
    $region33: #{independent_model_forward.1} parent=1 // pred_fallthru
      _
    // Predicated region
    $region34: #{independent_model_forward.1} parent=1 // pred_check
      _
    $region35: #{independent_model_forward.1} parent=1 // pred_check_branch
      %32 = sbr.rel (0) target = $region37
    $region36: #{independent_model_forward.1} parent=1 // pred_region
      _
    $region37: #{independent_model_forward.1} parent=1 // pred_fallthru
      _
    %v33 = vld [vmem:[%s0] sm:$0xff]
    %v34 = vld [vmem:[%s0 + $0x8] sm:$0xff]
    %v35 = vld [vmem:[%s0 + $0x10] sm:$0xff]
    %v36 = vld [vmem:[%s0 + $0x18] sm:$0xff]
    %v37 = vld [vmem:[%s0 + $0x20] sm:$0xff]
    %v38 = vld [vmem:[%s0 + $0x28] sm:$0xff]
    %v39 = vld [vmem:[%s0 + $0x30] sm:$0xff]
    %v40 = vld [vmem:[%s0 + $0x38] sm:$0xff]
    %v41 = vld [vmem:[%s0 + $0x40] sm:$0xff]
    %v42 = vld [vmem:[%s0 + $0x48] sm:$0xff]
    %v43 = vld [vmem:[%s0 + $0x50] sm:$0xff]
    %v44 = vld [vmem:[%s0 + $0x58] sm:$0xff]
    %v45 = vld [vmem:[%s0 + $0x60] sm:$0xff]
    %v46 = vld [vmem:[%s0 + $0x68] sm:$0xff]
    %v47 = vld [vmem:[%s0 + $0x70] sm:$0xff]
    %v48 = vld [vmem:[%s0 + $0x78] sm:$0xff]
    %v49 = vld [vmem:[%s0 + $0x80] sm:$0xff]
    %v50 = vld [vmem:[%s0 + $0x88] sm:$0xff]
    %v51 = vld [vmem:[%s0 + $0x90] sm:$0xff]
    %v52 = vld [vmem:[%s0 + $0x98] sm:$0xff]
    %v53 = vld [vmem:[%s0 + $0xa0] sm:$0xff]
    %v54 = vld [vmem:[%s0 + $0xa8] sm:$0xff]
    %v55 = vld [vmem:[%s0 + $0xb0] sm:$0xff]
    %v56 = vld [vmem:[%s0 + $0xb8] sm:$0xff]
    %v57 = vld [vmem:[%s0 + $0xc0] sm:$0xff]
    %v58 = vld [vmem:[%s0 + $0xc8] sm:$0xff]
    %v59 = vld [vmem:[%s0 + $0xd0] sm:$0xff]
    %v60 = vld [vmem:[%s0 + $0xd8] sm:$0xff]
    %v61 = vld [vmem:[%s0 + $0xe0] sm:$0xff]
    %v62 = vld [vmem:[%s0 + $0xe8] sm:$0xff]
    %v63 = vld [vmem:[%s0 + $0xf0] sm:$0xff]
    %v64 = vld [vmem:[%s0 + $0xf8] sm:$0xff]
    %v65 = vld [vmem:[%s0 + $0x100] sm:$0xff]
    %v66 = vld [vmem:[%s0 + $0x108] sm:$0xff]
    %v67 = vld [vmem:[%s0 + $0x110] sm:$0xff]
    %v68 = vld [vmem:[%s0 + $0x118] sm:$0xff]
    %v69 = vld [vmem:[%s0 + $0x120] sm:$0xff]
    %v70 = vld [vmem:[%s0 + $0x128] sm:$0xff]
    %v71 = vld [vmem:[%s0 + $0x130] sm:$0xff]
    %v72 = vld [vmem:[%s0 + $0x138] sm:$0xff]
    %v73 = vld [vmem:[%s0 + $0x140] sm:$0xff]
    %v74 = vld [vmem:[%s0 + $0x148] sm:$0xff]
    %v75 = vld [vmem:[%s0 + $0x150] sm:$0xff]
    %v76 = vld [vmem:[%s0 + $0x158] sm:$0xff]
    %v77 = vld [vmem:[%s0 + $0x160] sm:$0xff]
    %v78 = vld [vmem:[%s0 + $0x168] sm:$0xff]
    %v79 = vld [vmem:[%s0 + $0x170] sm:$0xff]
    %v80 = vld [vmem:[%s0 + $0x178] sm:$0xff]
    %v81 = vld [vmem:[%s0 + $0x180] sm:$0xff]
    %v82 = vld [vmem:[%s0 + $0x188] sm:$0xff]
    %v83 = vld [vmem:[%s0 + $0x190] sm:$0xff]
    %v84 = vld [vmem:[%s0 + $0x198] sm:$0xff]
    %v85 = vld [vmem:[%s0 + $0x1a0] sm:$0xff]
    %v86 = vld [vmem:[%s0 + $0x1a8] sm:$0xff]
    %v87 = vld [vmem:[%s0 + $0x1b0] sm:$0xff]
    %v88 = vld [vmem:[%s0 + $0x1b8] sm:$0xff]
    %v89 = vld [vmem:[%s0 + $0x1c0] sm:$0xff]
    %v90 = vld [vmem:[%s0 + $0x1c8] sm:$0xff]
    %v91 = vld [vmem:[%s0 + $0x1d0] sm:$0xff]
    %v92 = vld [vmem:[%s0 + $0x1d8] sm:$0xff]
    %v93 = vld [vmem:[%s0 + $0x1e0] sm:$0xff]
    %v94 = vld [vmem:[%s0 + $0x1e8] sm:$0xff]
    %v95 = vld [vmem:[%s0 + $0x1f0] sm:$0xff]
    %v96 = vld [vmem:[%s0 + $0x1f8] sm:$0xff]
    %v97 = vld [vmem:[%s1] sm:$0xf]
    %99 = vset.pattern.permute.xlu0 0
    %100 = vperm.xlu0 %99, %v33
    %v101 = vpop.permute.xlu0 %100
    %104 = vset.pattern.permute.xlu0 0
    %105 = vperm.xlu0 %104, %v34
    %v106 = vpop.permute.xlu0 %105
    %109 = vset.pattern.permute.xlu0 0
    %110 = vperm.xlu0 %109, %v35
    %v111 = vpop.permute.xlu0 %110
    %114 = vset.pattern.permute.xlu0 0
    %115 = vperm.xlu0 %114, %v36
    %v116 = vpop.permute.xlu0 %115
    %119 = vset.pattern.permute.xlu0 0
    %120 = vperm.xlu0 %119, %v37
    %v121 = vpop.permute.xlu0 %120
    %124 = vset.pattern.permute.xlu0 0
    %125 = vperm.xlu0 %124, %v38
    %v126 = vpop.permute.xlu0 %125
    %129 = vset.pattern.permute.xlu0 0
    %130 = vperm.xlu0 %129, %v39
    %v131 = vpop.permute.xlu0 %130
    %134 = vset.pattern.permute.xlu0 0
    %135 = vperm.xlu0 %134, %v40
    %v136 = vpop.permute.xlu0 %135
    %139 = vset.pattern.permute.xlu0 0
    %140 = vperm.xlu0 %139, %v41
    %v141 = vpop.permute.xlu0 %140
    %144 = vset.pattern.permute.xlu0 0
    %145 = vperm.xlu0 %144, %v42
    %v146 = vpop.permute.xlu0 %145
    %149 = vset.pattern.permute.xlu0 0
    %150 = vperm.xlu0 %149, %v43
    %v151 = vpop.permute.xlu0 %150
    %154 = vset.pattern.permute.xlu0 0
    %155 = vperm.xlu0 %154, %v44
    %v156 = vpop.permute.xlu0 %155
    %159 = vset.pattern.permute.xlu0 0
    %160 = vperm.xlu0 %159, %v45
    %v161 = vpop.permute.xlu0 %160
    %164 = vset.pattern.permute.xlu0 0
    %165 = vperm.xlu0 %164, %v46
    %v166 = vpop.permute.xlu0 %165
    %169 = vset.pattern.permute.xlu0 0
    %170 = vperm.xlu0 %169, %v47
    %v171 = vpop.permute.xlu0 %170
    %174 = vset.pattern.permute.xlu0 0
    %175 = vperm.xlu0 %174, %v48
    %v176 = vpop.permute.xlu0 %175
    %179 = vset.pattern.permute.xlu0 0
    %180 = vperm.xlu0 %179, %v49
    %v181 = vpop.permute.xlu0 %180
    %184 = vset.pattern.permute.xlu0 0
    %185 = vperm.xlu0 %184, %v50
    %v186 = vpop.permute.xlu0 %185
    %189 = vset.pattern.permute.xlu0 0
    %190 = vperm.xlu0 %189, %v51
    %v191 = vpop.permute.xlu0 %190
    %194 = vset.pattern.permute.xlu0 0
    %195 = vperm.xlu0 %194, %v52
    %v196 = vpop.permute.xlu0 %195
    %199 = vset.pattern.permute.xlu0 0
    %200 = vperm.xlu0 %199, %v53
    %v201 = vpop.permute.xlu0 %200
    %204 = vset.pattern.permute.xlu0 0
    %205 = vperm.xlu0 %204, %v54
    %v206 = vpop.permute.xlu0 %205
    %209 = vset.pattern.permute.xlu0 0
    %210 = vperm.xlu0 %209, %v55
    %v211 = vpop.permute.xlu0 %210
    %214 = vset.pattern.permute.xlu0 0
    %215 = vperm.xlu0 %214, %v56
    %v216 = vpop.permute.xlu0 %215
    %219 = vset.pattern.permute.xlu0 0
    %220 = vperm.xlu0 %219, %v57
    %v221 = vpop.permute.xlu0 %220
    %224 = vset.pattern.permute.xlu0 0
    %225 = vperm.xlu0 %224, %v58
    %v226 = vpop.permute.xlu0 %225
    %229 = vset.pattern.permute.xlu0 0
    %230 = vperm.xlu0 %229, %v59
    %v231 = vpop.permute.xlu0 %230
    %234 = vset.pattern.permute.xlu0 0
    %235 = vperm.xlu0 %234, %v60
    %v236 = vpop.permute.xlu0 %235
    %239 = vset.pattern.permute.xlu0 0
    %240 = vperm.xlu0 %239, %v61
    %v241 = vpop.permute.xlu0 %240
    %244 = vset.pattern.permute.xlu0 0
    %245 = vperm.xlu0 %244, %v62
    %v246 = vpop.permute.xlu0 %245
    %249 = vset.pattern.permute.xlu0 0
    %250 = vperm.xlu0 %249, %v63
    %v251 = vpop.permute.xlu0 %250
    %254 = vset.pattern.permute.xlu0 0
    %255 = vperm.xlu0 %254, %v64
    %v256 = vpop.permute.xlu0 %255
    %259 = vset.pattern.permute.xlu0 0
    %260 = vperm.xlu0 %259, %v65
    %v261 = vpop.permute.xlu0 %260
    %264 = vset.pattern.permute.xlu0 0
    %265 = vperm.xlu0 %264, %v66
    %v266 = vpop.permute.xlu0 %265
    %269 = vset.pattern.permute.xlu0 0
    %270 = vperm.xlu0 %269, %v67
    %v271 = vpop.permute.xlu0 %270
    %274 = vset.pattern.permute.xlu0 0
    %275 = vperm.xlu0 %274, %v68
    %v276 = vpop.permute.xlu0 %275
    %279 = vset.pattern.permute.xlu0 0
    %280 = vperm.xlu0 %279, %v69
    %v281 = vpop.permute.xlu0 %280
    %284 = vset.pattern.permute.xlu0 0
    %285 = vperm.xlu0 %284, %v70
    %v286 = vpop.permute.xlu0 %285
    %289 = vset.pattern.permute.xlu0 0
    %290 = vperm.xlu0 %289, %v71
    %v291 = vpop.permute.xlu0 %290
    %294 = vset.pattern.permute.xlu0 0
    %295 = vperm.xlu0 %294, %v72
    %v296 = vpop.permute.xlu0 %295
    %299 = vset.pattern.permute.xlu0 0
    %300 = vperm.xlu0 %299, %v73
    %v301 = vpop.permute.xlu0 %300
    %304 = vset.pattern.permute.xlu0 0
    %305 = vperm.xlu0 %304, %v74
    %v306 = vpop.permute.xlu0 %305
    %309 = vset.pattern.permute.xlu0 0
    %310 = vperm.xlu0 %309, %v75
    %v311 = vpop.permute.xlu0 %310
    %314 = vset.pattern.permute.xlu0 0
    %315 = vperm.xlu0 %314, %v76
    %v316 = vpop.permute.xlu0 %315
    %319 = vset.pattern.permute.xlu0 0
    %320 = vperm.xlu0 %319, %v77
    %v321 = vpop.permute.xlu0 %320
    %324 = vset.pattern.permute.xlu0 0
    %325 = vperm.xlu0 %324, %v78
    %v326 = vpop.permute.xlu0 %325
    %329 = vset.pattern.permute.xlu0 0
    %330 = vperm.xlu0 %329, %v79
    %v331 = vpop.permute.xlu0 %330
    %334 = vset.pattern.permute.xlu0 0
    %335 = vperm.xlu0 %334, %v80
    %v336 = vpop.permute.xlu0 %335
    %339 = vset.pattern.permute.xlu0 0
    %340 = vperm.xlu0 %339, %v81
    %v341 = vpop.permute.xlu0 %340
    %344 = vset.pattern.permute.xlu0 0
    %345 = vperm.xlu0 %344, %v82
    %v346 = vpop.permute.xlu0 %345
    %349 = vset.pattern.permute.xlu0 0
    %350 = vperm.xlu0 %349, %v83
    %v351 = vpop.permute.xlu0 %350
    %354 = vset.pattern.permute.xlu0 0
    %355 = vperm.xlu0 %354, %v84
    %v356 = vpop.permute.xlu0 %355
    %359 = vset.pattern.permute.xlu0 0
    %360 = vperm.xlu0 %359, %v85
    %v361 = vpop.permute.xlu0 %360
    %364 = vset.pattern.permute.xlu0 0
    %365 = vperm.xlu0 %364, %v86
    %v366 = vpop.permute.xlu0 %365
    %369 = vset.pattern.permute.xlu0 0
    %370 = vperm.xlu0 %369, %v87
    %v371 = vpop.permute.xlu0 %370
    %374 = vset.pattern.permute.xlu0 0
    %375 = vperm.xlu0 %374, %v88
    %v376 = vpop.permute.xlu0 %375
    %379 = vset.pattern.permute.xlu0 0
    %380 = vperm.xlu0 %379, %v89
    %v381 = vpop.permute.xlu0 %380
    %384 = vset.pattern.permute.xlu0 0
    %385 = vperm.xlu0 %384, %v90
    %v386 = vpop.permute.xlu0 %385
    %389 = vset.pattern.permute.xlu0 0
    %390 = vperm.xlu0 %389, %v91
    %v391 = vpop.permute.xlu0 %390
    %394 = vset.pattern.permute.xlu0 0
    %395 = vperm.xlu0 %394, %v92
    %v396 = vpop.permute.xlu0 %395
    %399 = vset.pattern.permute.xlu0 0
    %400 = vperm.xlu0 %399, %v93
    %v401 = vpop.permute.xlu0 %400
    %404 = vset.pattern.permute.xlu0 0
    %405 = vperm.xlu0 %404, %v94
    %v406 = vpop.permute.xlu0 %405
    %409 = vset.pattern.permute.xlu0 0
    %410 = vperm.xlu0 %409, %v95
    %v411 = vpop.permute.xlu0 %410
    %414 = vset.pattern.permute.xlu0 0
    %415 = vperm.xlu0 %414, %v96
    %v416 = vpop.permute.xlu0 %415
    %v418 = vlaneseq
    %v419 = vshrl.u32 %v418, 7
    %v420 = vsub.s32 0, %v419
    %v421 = vrot.slane %v97, %v420
    %v422 = vmul.f32 %v101, %v421
    %v423 = vmul.f32 %v106, %v421
    %v424 = vmul.f32 %v111, %v421
    %v425 = vmul.f32 %v116, %v421
    %v426 = vmul.f32 %v121, %v421
    %v427 = vmul.f32 %v126, %v421
    %v428 = vmul.f32 %v131, %v421
    %v429 = vmul.f32 %v136, %v421
    %v430 = vmul.f32 %v141, %v421
    %v431 = vmul.f32 %v146, %v421
    %v432 = vmul.f32 %v151, %v421
    %v433 = vmul.f32 %v156, %v421
    %v434 = vmul.f32 %v161, %v421
    %v435 = vmul.f32 %v166, %v421
    %v436 = vmul.f32 %v171, %v421
    %v437 = vmul.f32 %v176, %v421
    %v438 = vmul.f32 %v181, %v421
    %v439 = vmul.f32 %v186, %v421
    %v440 = vmul.f32 %v191, %v421
    %v441 = vmul.f32 %v196, %v421
    %v442 = vmul.f32 %v201, %v421
    %v443 = vmul.f32 %v206, %v421
    %v444 = vmul.f32 %v211, %v421
    %v445 = vmul.f32 %v216, %v421
    %v446 = vmul.f32 %v221, %v421
    %v447 = vmul.f32 %v226, %v421
    %v448 = vmul.f32 %v231, %v421
    %v449 = vmul.f32 %v236, %v421
    %v450 = vmul.f32 %v241, %v421
    %v451 = vmul.f32 %v246, %v421
    %v452 = vmul.f32 %v251, %v421
    %v453 = vmul.f32 %v256, %v421
    %v454 = vmul.f32 %v261, %v421
    %v455 = vmul.f32 %v266, %v421
    %v456 = vmul.f32 %v271, %v421
    %v457 = vmul.f32 %v276, %v421
    %v458 = vmul.f32 %v281, %v421
    %v459 = vmul.f32 %v286, %v421
    %v460 = vmul.f32 %v291, %v421
    %v461 = vmul.f32 %v296, %v421
    %v462 = vmul.f32 %v301, %v421
    %v463 = vmul.f32 %v306, %v421
    %v464 = vmul.f32 %v311, %v421
    %v465 = vmul.f32 %v316, %v421
    %v466 = vmul.f32 %v321, %v421
    %v467 = vmul.f32 %v326, %v421
    %v468 = vmul.f32 %v331, %v421
    %v469 = vmul.f32 %v336, %v421
    %v470 = vmul.f32 %v341, %v421
    %v471 = vmul.f32 %v346, %v421
    %v472 = vmul.f32 %v351, %v421
    %v473 = vmul.f32 %v356, %v421
    %v474 = vmul.f32 %v361, %v421
    %v475 = vmul.f32 %v366, %v421
    %v476 = vmul.f32 %v371, %v421
    %v477 = vmul.f32 %v376, %v421
    %v478 = vmul.f32 %v381, %v421
    %v479 = vmul.f32 %v386, %v421
    %v480 = vmul.f32 %v391, %v421
    %v481 = vmul.f32 %v396, %v421
    %v482 = vmul.f32 %v401, %v421
    %v483 = vmul.f32 %v406, %v421
    %v484 = vmul.f32 %v411, %v421
    %v485 = vmul.f32 %v416, %v421
    %v486 = vadd.f32 %v422, 0.0
    %v487 = vadd.f32 %v423, 0.0
    %v488 = vadd.f32 %v424, 0.0
    %v489 = vadd.f32 %v425, 0.0
    %v490 = vadd.f32 %v426, 0.0
    %v491 = vadd.f32 %v427, 0.0
    %v492 = vadd.f32 %v428, 0.0
    %v493 = vadd.f32 %v429, 0.0
    %v494 = vadd.f32 %v430, 0.0
    %v495 = vadd.f32 %v431, 0.0
    %v496 = vadd.f32 %v432, 0.0
    %v497 = vadd.f32 %v433, 0.0
    %v498 = vadd.f32 %v434, 0.0
    %v499 = vadd.f32 %v435, 0.0
    %v500 = vadd.f32 %v436, 0.0
    %v501 = vadd.f32 %v437, 0.0
    %v502 = vadd.f32 %v438, 0.0
    %v503 = vadd.f32 %v439, 0.0
    %v504 = vadd.f32 %v440, 0.0
    %v505 = vadd.f32 %v441, 0.0
    %v506 = vadd.f32 %v442, 0.0
    %v507 = vadd.f32 %v443, 0.0
    %v508 = vadd.f32 %v444, 0.0
    %v509 = vadd.f32 %v445, 0.0
    %v510 = vadd.f32 %v446, 0.0
    %v511 = vadd.f32 %v447, 0.0
    %v512 = vadd.f32 %v448, 0.0
    %v513 = vadd.f32 %v449, 0.0
    %v514 = vadd.f32 %v450, 0.0
    %v515 = vadd.f32 %v451, 0.0
    %v516 = vadd.f32 %v452, 0.0
    %v517 = vadd.f32 %v453, 0.0
    %v518 = vadd.f32 %v454, 0.0
    %v519 = vadd.f32 %v455, 0.0
    %v520 = vadd.f32 %v456, 0.0
    %v521 = vadd.f32 %v457, 0.0
    %v522 = vadd.f32 %v458, 0.0
    %v523 = vadd.f32 %v459, 0.0
    %v524 = vadd.f32 %v460, 0.0
    %v525 = vadd.f32 %v461, 0.0
    %v526 = vadd.f32 %v462, 0.0
    %v527 = vadd.f32 %v463, 0.0
    %v528 = vadd.f32 %v464, 0.0
    %v529 = vadd.f32 %v465, 0.0
    %v530 = vadd.f32 %v466, 0.0
    %v531 = vadd.f32 %v467, 0.0
    %v532 = vadd.f32 %v468, 0.0
    %v533 = vadd.f32 %v469, 0.0
    %v534 = vadd.f32 %v470, 0.0
    %v535 = vadd.f32 %v471, 0.0
    %v536 = vadd.f32 %v472, 0.0
    %v537 = vadd.f32 %v473, 0.0
    %v538 = vadd.f32 %v474, 0.0
    %v539 = vadd.f32 %v475, 0.0
    %v540 = vadd.f32 %v476, 0.0
    %v541 = vadd.f32 %v477, 0.0
    %v542 = vadd.f32 %v478, 0.0
    %v543 = vadd.f32 %v479, 0.0
    %v544 = vadd.f32 %v480, 0.0
    %v545 = vadd.f32 %v481, 0.0
    %v546 = vadd.f32 %v482, 0.0
    %v547 = vadd.f32 %v483, 0.0
    %v548 = vadd.f32 %v484, 0.0
    %v549 = vadd.f32 %v485, 0.0
    %550 = vset.pattern.permute.xlu0 1
    %551 = vperm.xlu0 %550, %v33
    %v552 = vpop.permute.xlu0 %551
    %554 = vset.pattern.permute.xlu0 1
    %555 = vperm.xlu0 %554, %v34
    %v556 = vpop.permute.xlu0 %555
    %558 = vset.pattern.permute.xlu0 1
    %559 = vperm.xlu0 %558, %v35
    %v560 = vpop.permute.xlu0 %559
    %562 = vset.pattern.permute.xlu0 1
    %563 = vperm.xlu0 %562, %v36
    %v564 = vpop.permute.xlu0 %563
    %566 = vset.pattern.permute.xlu0 1
    %567 = vperm.xlu0 %566, %v37
    %v568 = vpop.permute.xlu0 %567
    %570 = vset.pattern.permute.xlu0 1
    %571 = vperm.xlu0 %570, %v38
    %v572 = vpop.permute.xlu0 %571
    %574 = vset.pattern.permute.xlu0 1
    %575 = vperm.xlu0 %574, %v39
    %v576 = vpop.permute.xlu0 %575
    %578 = vset.pattern.permute.xlu0 1
    %579 = vperm.xlu0 %578, %v40
    %v580 = vpop.permute.xlu0 %579
    %582 = vset.pattern.permute.xlu0 1
    %583 = vperm.xlu0 %582, %v41
    %v584 = vpop.permute.xlu0 %583
    %586 = vset.pattern.permute.xlu0 1
    %587 = vperm.xlu0 %586, %v42
    %v588 = vpop.permute.xlu0 %587
    %590 = vset.pattern.permute.xlu0 1
    %591 = vperm.xlu0 %590, %v43
    %v592 = vpop.permute.xlu0 %591
    %594 = vset.pattern.permute.xlu0 1
    %595 = vperm.xlu0 %594, %v44
    %v596 = vpop.permute.xlu0 %595
    %598 = vset.pattern.permute.xlu0 1
    %599 = vperm.xlu0 %598, %v45
    %v600 = vpop.permute.xlu0 %599
    %602 = vset.pattern.permute.xlu0 1
    %603 = vperm.xlu0 %602, %v46
    %v604 = vpop.permute.xlu0 %603
    %606 = vset.pattern.permute.xlu0 1
    %607 = vperm.xlu0 %606, %v47
    %v608 = vpop.permute.xlu0 %607
    %610 = vset.pattern.permute.xlu0 1
    %611 = vperm.xlu0 %610, %v48
    %v612 = vpop.permute.xlu0 %611
    %614 = vset.pattern.permute.xlu0 1
    %615 = vperm.xlu0 %614, %v49
    %v616 = vpop.permute.xlu0 %615
    %618 = vset.pattern.permute.xlu0 1
    %619 = vperm.xlu0 %618, %v50
    %v620 = vpop.permute.xlu0 %619
    %622 = vset.pattern.permute.xlu0 1
    %623 = vperm.xlu0 %622, %v51
    %v624 = vpop.permute.xlu0 %623
    %626 = vset.pattern.permute.xlu0 1
    %627 = vperm.xlu0 %626, %v52
    %v628 = vpop.permute.xlu0 %627
    %630 = vset.pattern.permute.xlu0 1
    %631 = vperm.xlu0 %630, %v53
    %v632 = vpop.permute.xlu0 %631
    %634 = vset.pattern.permute.xlu0 1
    %635 = vperm.xlu0 %634, %v54
    %v636 = vpop.permute.xlu0 %635
    %638 = vset.pattern.permute.xlu0 1
    %639 = vperm.xlu0 %638, %v55
    %v640 = vpop.permute.xlu0 %639
    %642 = vset.pattern.permute.xlu0 1
    %643 = vperm.xlu0 %642, %v56
    %v644 = vpop.permute.xlu0 %643
    %646 = vset.pattern.permute.xlu0 1
    %647 = vperm.xlu0 %646, %v57
    %v648 = vpop.permute.xlu0 %647
    %650 = vset.pattern.permute.xlu0 1
    %651 = vperm.xlu0 %650, %v58
    %v652 = vpop.permute.xlu0 %651
    %654 = vset.pattern.permute.xlu0 1
    %655 = vperm.xlu0 %654, %v59
    %v656 = vpop.permute.xlu0 %655
    %658 = vset.pattern.permute.xlu0 1
    %659 = vperm.xlu0 %658, %v60
    %v660 = vpop.permute.xlu0 %659
    %662 = vset.pattern.permute.xlu0 1
    %663 = vperm.xlu0 %662, %v61
    %v664 = vpop.permute.xlu0 %663
    %666 = vset.pattern.permute.xlu0 1
    %667 = vperm.xlu0 %666, %v62
    %v668 = vpop.permute.xlu0 %667
    %670 = vset.pattern.permute.xlu0 1
    %671 = vperm.xlu0 %670, %v63
    %v672 = vpop.permute.xlu0 %671
    %674 = vset.pattern.permute.xlu0 1
    %675 = vperm.xlu0 %674, %v64
    %v676 = vpop.permute.xlu0 %675
    %678 = vset.pattern.permute.xlu0 1
    %679 = vperm.xlu0 %678, %v65
    %v680 = vpop.permute.xlu0 %679
    %682 = vset.pattern.permute.xlu0 1
    %683 = vperm.xlu0 %682, %v66
    %v684 = vpop.permute.xlu0 %683
    %686 = vset.pattern.permute.xlu0 1
    %687 = vperm.xlu0 %686, %v67
    %v688 = vpop.permute.xlu0 %687
    %690 = vset.pattern.permute.xlu0 1
    %691 = vperm.xlu0 %690, %v68
    %v692 = vpop.permute.xlu0 %691
    %694 = vset.pattern.permute.xlu0 1
    %695 = vperm.xlu0 %694, %v69
    %v696 = vpop.permute.xlu0 %695
    %698 = vset.pattern.permute.xlu0 1
    %699 = vperm.xlu0 %698, %v70
    %v700 = vpop.permute.xlu0 %699
    %702 = vset.pattern.permute.xlu0 1
    %703 = vperm.xlu0 %702, %v71
    %v704 = vpop.permute.xlu0 %703
    %706 = vset.pattern.permute.xlu0 1
    %707 = vperm.xlu0 %706, %v72
    %v708 = vpop.permute.xlu0 %707
    %710 = vset.pattern.permute.xlu0 1
    %711 = vperm.xlu0 %710, %v73
    %v712 = vpop.permute.xlu0 %711
    %714 = vset.pattern.permute.xlu0 1
    %715 = vperm.xlu0 %714, %v74
    %v716 = vpop.permute.xlu0 %715
    %718 = vset.pattern.permute.xlu0 1
    %719 = vperm.xlu0 %718, %v75
    %v720 = vpop.permute.xlu0 %719
    %722 = vset.pattern.permute.xlu0 1
    %723 = vperm.xlu0 %722, %v76
    %v724 = vpop.permute.xlu0 %723
    %726 = vset.pattern.permute.xlu0 1
    %727 = vperm.xlu0 %726, %v77
    %v728 = vpop.permute.xlu0 %727
    %730 = vset.pattern.permute.xlu0 1
    %731 = vperm.xlu0 %730, %v78
    %v732 = vpop.permute.xlu0 %731
    %734 = vset.pattern.permute.xlu0 1
    %735 = vperm.xlu0 %734, %v79
    %v736 = vpop.permute.xlu0 %735
    %738 = vset.pattern.permute.xlu0 1
    %739 = vperm.xlu0 %738, %v80
    %v740 = vpop.permute.xlu0 %739
    %742 = vset.pattern.permute.xlu0 1
    %743 = vperm.xlu0 %742, %v81
    %v744 = vpop.permute.xlu0 %743
    %746 = vset.pattern.permute.xlu0 1
    %747 = vperm.xlu0 %746, %v82
    %v748 = vpop.permute.xlu0 %747
    %750 = vset.pattern.permute.xlu0 1
    %751 = vperm.xlu0 %750, %v83
    %v752 = vpop.permute.xlu0 %751
    %754 = vset.pattern.permute.xlu0 1
    %755 = vperm.xlu0 %754, %v84
    %v756 = vpop.permute.xlu0 %755
    %758 = vset.pattern.permute.xlu0 1
    %759 = vperm.xlu0 %758, %v85
    %v760 = vpop.permute.xlu0 %759
    %762 = vset.pattern.permute.xlu0 1
    %763 = vperm.xlu0 %762, %v86
    %v764 = vpop.permute.xlu0 %763
    %766 = vset.pattern.permute.xlu0 1
    %767 = vperm.xlu0 %766, %v87
    %v768 = vpop.permute.xlu0 %767
    %770 = vset.pattern.permute.xlu0 1
    %771 = vperm.xlu0 %770, %v88
    %v772 = vpop.permute.xlu0 %771
    %774 = vset.pattern.permute.xlu0 1
    %775 = vperm.xlu0 %774, %v89
    %v776 = vpop.permute.xlu0 %775
    %778 = vset.pattern.permute.xlu0 1
    %779 = vperm.xlu0 %778, %v90
    %v780 = vpop.permute.xlu0 %779
    %782 = vset.pattern.permute.xlu0 1
    %783 = vperm.xlu0 %782, %v91
    %v784 = vpop.permute.xlu0 %783
    %786 = vset.pattern.permute.xlu0 1
    %787 = vperm.xlu0 %786, %v92
    %v788 = vpop.permute.xlu0 %787
    %790 = vset.pattern.permute.xlu0 1
    %791 = vperm.xlu0 %790, %v93
    %v792 = vpop.permute.xlu0 %791
    %794 = vset.pattern.permute.xlu0 1
    %795 = vperm.xlu0 %794, %v94
    %v796 = vpop.permute.xlu0 %795
    %798 = vset.pattern.permute.xlu0 1
    %799 = vperm.xlu0 %798, %v95
    %v800 = vpop.permute.xlu0 %799
    %802 = vset.pattern.permute.xlu0 1
    %803 = vperm.xlu0 %802, %v96
    %v804 = vpop.permute.xlu0 %803
    %v806 = vlaneseq
    %v807 = vshrl.u32 %v806, 7
    %v808 = vsub.s32 1, %v807
    %v809 = vrot.slane %v97, %v808
    %v810 = vmul.f32 %v552, %v809
    %v811 = vmul.f32 %v556, %v809
    %v812 = vmul.f32 %v560, %v809
    %v813 = vmul.f32 %v564, %v809
    %v814 = vmul.f32 %v568, %v809
    %v815 = vmul.f32 %v572, %v809
    %v816 = vmul.f32 %v576, %v809
    %v817 = vmul.f32 %v580, %v809
    %v818 = vmul.f32 %v584, %v809
    %v819 = vmul.f32 %v588, %v809
    %v820 = vmul.f32 %v592, %v809
    %v821 = vmul.f32 %v596, %v809
    %v822 = vmul.f32 %v600, %v809
    %v823 = vmul.f32 %v604, %v809
    %v824 = vmul.f32 %v608, %v809
    %v825 = vmul.f32 %v612, %v809
    %v826 = vmul.f32 %v616, %v809
    %v827 = vmul.f32 %v620, %v809
    %v828 = vmul.f32 %v624, %v809
    %v829 = vmul.f32 %v628, %v809
    %v830 = vmul.f32 %v632, %v809
    %v831 = vmul.f32 %v636, %v809
    %v832 = vmul.f32 %v640, %v809
    %v833 = vmul.f32 %v644, %v809
    %v834 = vmul.f32 %v648, %v809
    %v835 = vmul.f32 %v652, %v809
    %v836 = vmul.f32 %v656, %v809
    %v837 = vmul.f32 %v660, %v809
    %v838 = vmul.f32 %v664, %v809
    %v839 = vmul.f32 %v668, %v809
    %v840 = vmul.f32 %v672, %v809
    %v841 = vmul.f32 %v676, %v809
    %v842 = vmul.f32 %v680, %v809
    %v843 = vmul.f32 %v684, %v809
    %v844 = vmul.f32 %v688, %v809
    %v845 = vmul.f32 %v692, %v809
    %v846 = vmul.f32 %v696, %v809
    %v847 = vmul.f32 %v700, %v809
    %v848 = vmul.f32 %v704, %v809
    %v849 = vmul.f32 %v708, %v809
    %v850 = vmul.f32 %v712, %v809
    %v851 = vmul.f32 %v716, %v809
    %v852 = vmul.f32 %v720, %v809
    %v853 = vmul.f32 %v724, %v809
    %v854 = vmul.f32 %v728, %v809
    %v855 = vmul.f32 %v732, %v809
    %v856 = vmul.f32 %v736, %v809
    %v857 = vmul.f32 %v740, %v809
    %v858 = vmul.f32 %v744, %v809
    %v859 = vmul.f32 %v748, %v809
    %v860 = vmul.f32 %v752, %v809
    %v861 = vmul.f32 %v756, %v809
    %v862 = vmul.f32 %v760, %v809
    %v863 = vmul.f32 %v764, %v809
    %v864 = vmul.f32 %v768, %v809
    %v865 = vmul.f32 %v772, %v809
    %v866 = vmul.f32 %v776, %v809
    %v867 = vmul.f32 %v780, %v809
    %v868 = vmul.f32 %v784, %v809
    %v869 = vmul.f32 %v788, %v809
    %v870 = vmul.f32 %v792, %v809
    %v871 = vmul.f32 %v796, %v809
    %v872 = vmul.f32 %v800, %v809
    %v873 = vmul.f32 %v804, %v809
    %v874 = vadd.f32 %v486, %v810
    %v875 = vadd.f32 %v487, %v811
    %v876 = vadd.f32 %v488, %v812
    %v877 = vadd.f32 %v489, %v813
    %v878 = vadd.f32 %v490, %v814
    %v879 = vadd.f32 %v491, %v815
    %v880 = vadd.f32 %v492, %v816
    %v881 = vadd.f32 %v493, %v817
    %v882 = vadd.f32 %v494, %v818
    %v883 = vadd.f32 %v495, %v819
    %v884 = vadd.f32 %v496, %v820
    %v885 = vadd.f32 %v497, %v821
    %v886 = vadd.f32 %v498, %v822
    %v887 = vadd.f32 %v499, %v823
    %v888 = vadd.f32 %v500, %v824
    %v889 = vadd.f32 %v501, %v825
    %v890 = vadd.f32 %v502, %v826
    %v891 = vadd.f32 %v503, %v827
    %v892 = vadd.f32 %v504, %v828
    %v893 = vadd.f32 %v505, %v829
    %v894 = vadd.f32 %v506, %v830
    %v895 = vadd.f32 %v507, %v831
    %v896 = vadd.f32 %v508, %v832
    %v897 = vadd.f32 %v509, %v833
    %v898 = vadd.f32 %v510, %v834
    %v899 = vadd.f32 %v511, %v835
    %v900 = vadd.f32 %v512, %v836
    %v901 = vadd.f32 %v513, %v837
    %v902 = vadd.f32 %v514, %v838
    %v903 = vadd.f32 %v515, %v839
    %v904 = vadd.f32 %v516, %v840
    %v905 = vadd.f32 %v517, %v841
    %v906 = vadd.f32 %v518, %v842
    %v907 = vadd.f32 %v519, %v843
    %v908 = vadd.f32 %v520, %v844
    %v909 = vadd.f32 %v521, %v845
    %v910 = vadd.f32 %v522, %v846
    %v911 = vadd.f32 %v523, %v847
    %v912 = vadd.f32 %v524, %v848
    %v913 = vadd.f32 %v525, %v849
    %v914 = vadd.f32 %v526, %v850
    %v915 = vadd.f32 %v527, %v851
    %v916 = vadd.f32 %v528, %v852
    %v917 = vadd.f32 %v529, %v853
    %v918 = vadd.f32 %v530, %v854
    %v919 = vadd.f32 %v531, %v855
    %v920 = vadd.f32 %v532, %v856
    %v921 = vadd.f32 %v533, %v857
    %v922 = vadd.f32 %v534, %v858
    %v923 = vadd.f32 %v535, %v859
    %v924 = vadd.f32 %v536, %v860
    %v925 = vadd.f32 %v537, %v861
    %v926 = vadd.f32 %v538, %v862
    %v927 = vadd.f32 %v539, %v863
    %v928 = vadd.f32 %v540, %v864
    %v929 = vadd.f32 %v541, %v865
    %v930 = vadd.f32 %v542, %v866
    %v931 = vadd.f32 %v543, %v867
    %v932 = vadd.f32 %v544, %v868
    %v933 = vadd.f32 %v545, %v869
    %v934 = vadd.f32 %v546, %v870
    %v935 = vadd.f32 %v547, %v871
    %v936 = vadd.f32 %v548, %v872
    %v937 = vadd.f32 %v549, %v873
    %938 = vset.pattern.permute.xlu0 2
    %939 = vperm.xlu0 %938, %v33
    %v940 = vpop.permute.xlu0 %939
    %942 = vset.pattern.permute.xlu0 2
    %943 = vperm.xlu0 %942, %v34
    %v944 = vpop.permute.xlu0 %943
    %946 = vset.pattern.permute.xlu0 2
    %947 = vperm.xlu0 %946, %v35
    %v948 = vpop.permute.xlu0 %947
    %950 = vset.pattern.permute.xlu0 2
    %951 = vperm.xlu0 %950, %v36
    %v952 = vpop.permute.xlu0 %951
    %954 = vset.pattern.permute.xlu0 2
    %955 = vperm.xlu0 %954, %v37
    %v956 = vpop.permute.xlu0 %955
    %958 = vset.pattern.permute.xlu0 2
    %959 = vperm.xlu0 %958, %v38
    %v960 = vpop.permute.xlu0 %959
    %962 = vset.pattern.permute.xlu0 2
    %963 = vperm.xlu0 %962, %v39
    %v964 = vpop.permute.xlu0 %963
    %966 = vset.pattern.permute.xlu0 2
    %967 = vperm.xlu0 %966, %v40
    %v968 = vpop.permute.xlu0 %967
    %970 = vset.pattern.permute.xlu0 2
    %971 = vperm.xlu0 %970, %v41
    %v972 = vpop.permute.xlu0 %971
    %974 = vset.pattern.permute.xlu0 2
    %975 = vperm.xlu0 %974, %v42
    %v976 = vpop.permute.xlu0 %975
    %978 = vset.pattern.permute.xlu0 2
    %979 = vperm.xlu0 %978, %v43
    %v980 = vpop.permute.xlu0 %979
    %982 = vset.pattern.permute.xlu0 2
    %983 = vperm.xlu0 %982, %v44
    %v984 = vpop.permute.xlu0 %983
    %986 = vset.pattern.permute.xlu0 2
    %987 = vperm.xlu0 %986, %v45
    %v988 = vpop.permute.xlu0 %987
    %990 = vset.pattern.permute.xlu0 2
    %991 = vperm.xlu0 %990, %v46
    %v992 = vpop.permute.xlu0 %991
    %994 = vset.pattern.permute.xlu0 2
    %995 = vperm.xlu0 %994, %v47
    %v996 = vpop.permute.xlu0 %995
    %998 = vset.pattern.permute.xlu0 2
    %999 = vperm.xlu0 %998, %v48
    %v1000 = vpop.permute.xlu0 %999
    %1002 = vset.pattern.permute.xlu0 2
    %1003 = vperm.xlu0 %1002, %v49
    %v1004 = vpop.permute.xlu0 %1003
    %1006 = vset.pattern.permute.xlu0 2
    %1007 = vperm.xlu0 %1006, %v50
    %v1008 = vpop.permute.xlu0 %1007
    %1010 = vset.pattern.permute.xlu0 2
    %1011 = vperm.xlu0 %1010, %v51
    %v1012 = vpop.permute.xlu0 %1011
    %1014 = vset.pattern.permute.xlu0 2
    %1015 = vperm.xlu0 %1014, %v52
    %v1016 = vpop.permute.xlu0 %1015
    %1018 = vset.pattern.permute.xlu0 2
    %1019 = vperm.xlu0 %1018, %v53
    %v1020 = vpop.permute.xlu0 %1019
    %1022 = vset.pattern.permute.xlu0 2
    %1023 = vperm.xlu0 %1022, %v54
    %v1024 = vpop.permute.xlu0 %1023
    %1026 = vset.pattern.permute.xlu0 2
    %1027 = vperm.xlu0 %1026, %v55
    %v1028 = vpop.permute.xlu0 %1027
    %1030 = vset.pattern.permute.xlu0 2
    %1031 = vperm.xlu0 %1030, %v56
    %v1032 = vpop.permute.xlu0 %1031
    %1034 = vset.pattern.permute.xlu0 2
    %1035 = vperm.xlu0 %1034, %v57
    %v1036 = vpop.permute.xlu0 %1035
    %1038 = vset.pattern.permute.xlu0 2
    %1039 = vperm.xlu0 %1038, %v58
    %v1040 = vpop.permute.xlu0 %1039
    %1042 = vset.pattern.permute.xlu0 2
    %1043 = vperm.xlu0 %1042, %v59
    %v1044 = vpop.permute.xlu0 %1043
    %1046 = vset.pattern.permute.xlu0 2
    %1047 = vperm.xlu0 %1046, %v60
    %v1048 = vpop.permute.xlu0 %1047
    %1050 = vset.pattern.permute.xlu0 2
    %1051 = vperm.xlu0 %1050, %v61
    %v1052 = vpop.permute.xlu0 %1051
    %1054 = vset.pattern.permute.xlu0 2
    %1055 = vperm.xlu0 %1054, %v62
    %v1056 = vpop.permute.xlu0 %1055
    %1058 = vset.pattern.permute.xlu0 2
    %1059 = vperm.xlu0 %1058, %v63
    %v1060 = vpop.permute.xlu0 %1059
    %1062 = vset.pattern.permute.xlu0 2
    %1063 = vperm.xlu0 %1062, %v64
    %v1064 = vpop.permute.xlu0 %1063
    %1066 = vset.pattern.permute.xlu0 2
    %1067 = vperm.xlu0 %1066, %v65
    %v1068 = vpop.permute.xlu0 %1067
    %1070 = vset.pattern.permute.xlu0 2
    %1071 = vperm.xlu0 %1070, %v66
    %v1072 = vpop.permute.xlu0 %1071
    %1074 = vset.pattern.permute.xlu0 2
    %1075 = vperm.xlu0 %1074, %v67
    %v1076 = vpop.permute.xlu0 %1075
    %1078 = vset.pattern.permute.xlu0 2
    %1079 = vperm.xlu0 %1078, %v68
    %v1080 = vpop.permute.xlu0 %1079
    %1082 = vset.pattern.permute.xlu0 2
    %1083 = vperm.xlu0 %1082, %v69
    %v1084 = vpop.permute.xlu0 %1083
    %1086 = vset.pattern.permute.xlu0 2
    %1087 = vperm.xlu0 %1086, %v70
    %v1088 = vpop.permute.xlu0 %1087
    %1090 = vset.pattern.permute.xlu0 2
    %1091 = vperm.xlu0 %1090, %v71
    %v1092 = vpop.permute.xlu0 %1091
    %1094 = vset.pattern.permute.xlu0 2
    %1095 = vperm.xlu0 %1094, %v72
    %v1096 = vpop.permute.xlu0 %1095
    %1098 = vset.pattern.permute.xlu0 2
    %1099 = vperm.xlu0 %1098, %v73
    %v1100 = vpop.permute.xlu0 %1099
    %1102 = vset.pattern.permute.xlu0 2
    %1103 = vperm.xlu0 %1102, %v74
    %v1104 = vpop.permute.xlu0 %1103
    %1106 = vset.pattern.permute.xlu0 2
    %1107 = vperm.xlu0 %1106, %v75
    %v1108 = vpop.permute.xlu0 %1107
    %1110 = vset.pattern.permute.xlu0 2
    %1111 = vperm.xlu0 %1110, %v76
    %v1112 = vpop.permute.xlu0 %1111
    %1114 = vset.pattern.permute.xlu0 2
    %1115 = vperm.xlu0 %1114, %v77
    %v1116 = vpop.permute.xlu0 %1115
    %1118 = vset.pattern.permute.xlu0 2
    %1119 = vperm.xlu0 %1118, %v78
    %v1120 = vpop.permute.xlu0 %1119
    %1122 = vset.pattern.permute.xlu0 2
    %1123 = vperm.xlu0 %1122, %v79
    %v1124 = vpop.permute.xlu0 %1123
    %1126 = vset.pattern.permute.xlu0 2
    %1127 = vperm.xlu0 %1126, %v80
    %v1128 = vpop.permute.xlu0 %1127
    %1130 = vset.pattern.permute.xlu0 2
    %1131 = vperm.xlu0 %1130, %v81
    %v1132 = vpop.permute.xlu0 %1131
    %1134 = vset.pattern.permute.xlu0 2
    %1135 = vperm.xlu0 %1134, %v82
    %v1136 = vpop.permute.xlu0 %1135
    %1138 = vset.pattern.permute.xlu0 2
    %1139 = vperm.xlu0 %1138, %v83
    %v1140 = vpop.permute.xlu0 %1139
    %1142 = vset.pattern.permute.xlu0 2
    %1143 = vperm.xlu0 %1142, %v84
    %v1144 = vpop.permute.xlu0 %1143
    %1146 = vset.pattern.permute.xlu0 2
    %1147 = vperm.xlu0 %1146, %v85
    %v1148 = vpop.permute.xlu0 %1147
    %1150 = vset.pattern.permute.xlu0 2
    %1151 = vperm.xlu0 %1150, %v86
    %v1152 = vpop.permute.xlu0 %1151
    %1154 = vset.pattern.permute.xlu0 2
    %1155 = vperm.xlu0 %1154, %v87
    %v1156 = vpop.permute.xlu0 %1155
    %1158 = vset.pattern.permute.xlu0 2
    %1159 = vperm.xlu0 %1158, %v88
    %v1160 = vpop.permute.xlu0 %1159
    %1162 = vset.pattern.permute.xlu0 2
    %1163 = vperm.xlu0 %1162, %v89
    %v1164 = vpop.permute.xlu0 %1163
    %1166 = vset.pattern.permute.xlu0 2
    %1167 = vperm.xlu0 %1166, %v90
    %v1168 = vpop.permute.xlu0 %1167
    %1170 = vset.pattern.permute.xlu0 2
    %1171 = vperm.xlu0 %1170, %v91
    %v1172 = vpop.permute.xlu0 %1171
    %1174 = vset.pattern.permute.xlu0 2
    %1175 = vperm.xlu0 %1174, %v92
    %v1176 = vpop.permute.xlu0 %1175
    %1178 = vset.pattern.permute.xlu0 2
    %1179 = vperm.xlu0 %1178, %v93
    %v1180 = vpop.permute.xlu0 %1179
    %1182 = vset.pattern.permute.xlu0 2
    %1183 = vperm.xlu0 %1182, %v94
    %v1184 = vpop.permute.xlu0 %1183
    %1186 = vset.pattern.permute.xlu0 2
    %1187 = vperm.xlu0 %1186, %v95
    %v1188 = vpop.permute.xlu0 %1187
    %1190 = vset.pattern.permute.xlu0 2
    %1191 = vperm.xlu0 %1190, %v96
    %v1192 = vpop.permute.xlu0 %1191
    %v1194 = vlaneseq
    %v1195 = vshrl.u32 %v1194, 7
    %v1196 = vsub.s32 2, %v1195
    %v1197 = vrot.slane %v97, %v1196
    %v1198 = vmul.f32 %v940, %v1197
    %v1199 = vmul.f32 %v944, %v1197
    %v1200 = vmul.f32 %v948, %v1197
    %v1201 = vmul.f32 %v952, %v1197
    %v1202 = vmul.f32 %v956, %v1197
    %v1203 = vmul.f32 %v960, %v1197
    %v1204 = vmul.f32 %v964, %v1197
    %v1205 = vmul.f32 %v968, %v1197
    %v1206 = vmul.f32 %v972, %v1197
    %v1207 = vmul.f32 %v976, %v1197
    %v1208 = vmul.f32 %v980, %v1197
    %v1209 = vmul.f32 %v984, %v1197
    %v1210 = vmul.f32 %v988, %v1197
    %v1211 = vmul.f32 %v992, %v1197
    %v1212 = vmul.f32 %v996, %v1197
    %v1213 = vmul.f32 %v1000, %v1197
    %v1214 = vmul.f32 %v1004, %v1197
    %v1215 = vmul.f32 %v1008, %v1197
    %v1216 = vmul.f32 %v1012, %v1197
    %v1217 = vmul.f32 %v1016, %v1197
    %v1218 = vmul.f32 %v1020, %v1197
    %v1219 = vmul.f32 %v1024, %v1197
    %v1220 = vmul.f32 %v1028, %v1197
    %v1221 = vmul.f32 %v1032, %v1197
    %v1222 = vmul.f32 %v1036, %v1197
    %v1223 = vmul.f32 %v1040, %v1197
    %v1224 = vmul.f32 %v1044, %v1197
    %v1225 = vmul.f32 %v1048, %v1197
    %v1226 = vmul.f32 %v1052, %v1197
    %v1227 = vmul.f32 %v1056, %v1197
    %v1228 = vmul.f32 %v1060, %v1197
    %v1229 = vmul.f32 %v1064, %v1197
    %v1230 = vmul.f32 %v1068, %v1197
    %v1231 = vmul.f32 %v1072, %v1197
    %v1232 = vmul.f32 %v1076, %v1197
    %v1233 = vmul.f32 %v1080, %v1197
    %v1234 = vmul.f32 %v1084, %v1197
    %v1235 = vmul.f32 %v1088, %v1197
    %v1236 = vmul.f32 %v1092, %v1197
    %v1237 = vmul.f32 %v1096, %v1197
    %v1238 = vmul.f32 %v1100, %v1197
    %v1239 = vmul.f32 %v1104, %v1197
    %v1240 = vmul.f32 %v1108, %v1197
    %v1241 = vmul.f32 %v1112, %v1197
    %v1242 = vmul.f32 %v1116, %v1197
    %v1243 = vmul.f32 %v1120, %v1197
    %v1244 = vmul.f32 %v1124, %v1197
    %v1245 = vmul.f32 %v1128, %v1197
    %v1246 = vmul.f32 %v1132, %v1197
    %v1247 = vmul.f32 %v1136, %v1197
    %v1248 = vmul.f32 %v1140, %v1197
    %v1249 = vmul.f32 %v1144, %v1197
    %v1250 = vmul.f32 %v1148, %v1197
    %v1251 = vmul.f32 %v1152, %v1197
    %v1252 = vmul.f32 %v1156, %v1197
    %v1253 = vmul.f32 %v1160, %v1197
    %v1254 = vmul.f32 %v1164, %v1197
    %v1255 = vmul.f32 %v1168, %v1197
    %v1256 = vmul.f32 %v1172, %v1197
    %v1257 = vmul.f32 %v1176, %v1197
    %v1258 = vmul.f32 %v1180, %v1197
    %v1259 = vmul.f32 %v1184, %v1197
    %v1260 = vmul.f32 %v1188, %v1197
    %v1261 = vmul.f32 %v1192, %v1197
    %v1262 = vadd.f32 %v874, %v1198
    %v1263 = vadd.f32 %v875, %v1199
    %v1264 = vadd.f32 %v876, %v1200
    %v1265 = vadd.f32 %v877, %v1201
    %v1266 = vadd.f32 %v878, %v1202
    %v1267 = vadd.f32 %v879, %v1203
    %v1268 = vadd.f32 %v880, %v1204
    %v1269 = vadd.f32 %v881, %v1205
    %v1270 = vadd.f32 %v882, %v1206
    %v1271 = vadd.f32 %v883, %v1207
    %v1272 = vadd.f32 %v884, %v1208
    %v1273 = vadd.f32 %v885, %v1209
    %v1274 = vadd.f32 %v886, %v1210
    %v1275 = vadd.f32 %v887, %v1211
    %v1276 = vadd.f32 %v888, %v1212
    %v1277 = vadd.f32 %v889, %v1213
    %v1278 = vadd.f32 %v890, %v1214
    %v1279 = vadd.f32 %v891, %v1215
    %v1280 = vadd.f32 %v892, %v1216
    %v1281 = vadd.f32 %v893, %v1217
    %v1282 = vadd.f32 %v894, %v1218
    %v1283 = vadd.f32 %v895, %v1219
    %v1284 = vadd.f32 %v896, %v1220
    %v1285 = vadd.f32 %v897, %v1221
    %v1286 = vadd.f32 %v898, %v1222
    %v1287 = vadd.f32 %v899, %v1223
    %v1288 = vadd.f32 %v900, %v1224
    %v1289 = vadd.f32 %v901, %v1225
    %v1290 = vadd.f32 %v902, %v1226
    %v1291 = vadd.f32 %v903, %v1227
    %v1292 = vadd.f32 %v904, %v1228
    %v1293 = vadd.f32 %v905, %v1229
    %v1294 = vadd.f32 %v906, %v1230
    %v1295 = vadd.f32 %v907, %v1231
    %v1296 = vadd.f32 %v908, %v1232
    %v1297 = vadd.f32 %v909, %v1233
    %v1298 = vadd.f32 %v910, %v1234
    %v1299 = vadd.f32 %v911, %v1235
    %v1300 = vadd.f32 %v912, %v1236
    %v1301 = vadd.f32 %v913, %v1237
    %v1302 = vadd.f32 %v914, %v1238
    %v1303 = vadd.f32 %v915, %v1239
    %v1304 = vadd.f32 %v916, %v1240
    %v1305 = vadd.f32 %v917, %v1241
    %v1306 = vadd.f32 %v918, %v1242
    %v1307 = vadd.f32 %v919, %v1243
    %v1308 = vadd.f32 %v920, %v1244
    %v1309 = vadd.f32 %v921, %v1245
    %v1310 = vadd.f32 %v922, %v1246
    %v1311 = vadd.f32 %v923, %v1247
    %v1312 = vadd.f32 %v924, %v1248
    %v1313 = vadd.f32 %v925, %v1249
    %v1314 = vadd.f32 %v926, %v1250
    %v1315 = vadd.f32 %v927, %v1251
    %v1316 = vadd.f32 %v928, %v1252
    %v1317 = vadd.f32 %v929, %v1253
    %v1318 = vadd.f32 %v930, %v1254
    %v1319 = vadd.f32 %v931, %v1255
    %v1320 = vadd.f32 %v932, %v1256
    %v1321 = vadd.f32 %v933, %v1257
    %v1322 = vadd.f32 %v934, %v1258
    %v1323 = vadd.f32 %v935, %v1259
    %v1324 = vadd.f32 %v936, %v1260
    %v1325 = vadd.f32 %v937, %v1261
    %1326 = vset.pattern.permute.xlu0 3
    %1327 = vperm.xlu0 %1326, %v33
    %v1328 = vpop.permute.xlu0 %1327
    %1330 = vset.pattern.permute.xlu0 3
    %1331 = vperm.xlu0 %1330, %v34
    %v1332 = vpop.permute.xlu0 %1331
    %1334 = vset.pattern.permute.xlu0 3
    %1335 = vperm.xlu0 %1334, %v35
    %v1336 = vpop.permute.xlu0 %1335
    %1338 = vset.pattern.permute.xlu0 3
    %1339 = vperm.xlu0 %1338, %v36
    %v1340 = vpop.permute.xlu0 %1339
    %1342 = vset.pattern.permute.xlu0 3
    %1343 = vperm.xlu0 %1342, %v37
    %v1344 = vpop.permute.xlu0 %1343
    %1346 = vset.pattern.permute.xlu0 3
    %1347 = vperm.xlu0 %1346, %v38
    %v1348 = vpop.permute.xlu0 %1347
    %1350 = vset.pattern.permute.xlu0 3
    %1351 = vperm.xlu0 %1350, %v39
    %v1352 = vpop.permute.xlu0 %1351
    %1354 = vset.pattern.permute.xlu0 3
    %1355 = vperm.xlu0 %1354, %v40
    %v1356 = vpop.permute.xlu0 %1355
    %1358 = vset.pattern.permute.xlu0 3
    %1359 = vperm.xlu0 %1358, %v41
    %v1360 = vpop.permute.xlu0 %1359
    %1362 = vset.pattern.permute.xlu0 3
    %1363 = vperm.xlu0 %1362, %v42
    %v1364 = vpop.permute.xlu0 %1363
    %1366 = vset.pattern.permute.xlu0 3
    %1367 = vperm.xlu0 %1366, %v43
    %v1368 = vpop.permute.xlu0 %1367
    %1370 = vset.pattern.permute.xlu0 3
    %1371 = vperm.xlu0 %1370, %v44
    %v1372 = vpop.permute.xlu0 %1371
    %1374 = vset.pattern.permute.xlu0 3
    %1375 = vperm.xlu0 %1374, %v45
    %v1376 = vpop.permute.xlu0 %1375
    %1378 = vset.pattern.permute.xlu0 3
    %1379 = vperm.xlu0 %1378, %v46
    %v1380 = vpop.permute.xlu0 %1379
    %1382 = vset.pattern.permute.xlu0 3
    %1383 = vperm.xlu0 %1382, %v47
    %v1384 = vpop.permute.xlu0 %1383
    %1386 = vset.pattern.permute.xlu0 3
    %1387 = vperm.xlu0 %1386, %v48
    %v1388 = vpop.permute.xlu0 %1387
    %1390 = vset.pattern.permute.xlu0 3
    %1391 = vperm.xlu0 %1390, %v49
    %v1392 = vpop.permute.xlu0 %1391
    %1394 = vset.pattern.permute.xlu0 3
    %1395 = vperm.xlu0 %1394, %v50
    %v1396 = vpop.permute.xlu0 %1395
    %1398 = vset.pattern.permute.xlu0 3
    %1399 = vperm.xlu0 %1398, %v51
    %v1400 = vpop.permute.xlu0 %1399
    %1402 = vset.pattern.permute.xlu0 3
    %1403 = vperm.xlu0 %1402, %v52
    %v1404 = vpop.permute.xlu0 %1403
    %1406 = vset.pattern.permute.xlu0 3
    %1407 = vperm.xlu0 %1406, %v53
    %v1408 = vpop.permute.xlu0 %1407
    %1410 = vset.pattern.permute.xlu0 3
    %1411 = vperm.xlu0 %1410, %v54
    %v1412 = vpop.permute.xlu0 %1411
    %1414 = vset.pattern.permute.xlu0 3
    %1415 = vperm.xlu0 %1414, %v55
    %v1416 = vpop.permute.xlu0 %1415
    %1418 = vset.pattern.permute.xlu0 3
    %1419 = vperm.xlu0 %1418, %v56
    %v1420 = vpop.permute.xlu0 %1419
    %1422 = vset.pattern.permute.xlu0 3
    %1423 = vperm.xlu0 %1422, %v57
    %v1424 = vpop.permute.xlu0 %1423
    %1426 = vset.pattern.permute.xlu0 3
    %1427 = vperm.xlu0 %1426, %v58
    %v1428 = vpop.permute.xlu0 %1427
    %1430 = vset.pattern.permute.xlu0 3
    %1431 = vperm.xlu0 %1430, %v59
    %v1432 = vpop.permute.xlu0 %1431
    %1434 = vset.pattern.permute.xlu0 3
    %1435 = vperm.xlu0 %1434, %v60
    %v1436 = vpop.permute.xlu0 %1435
    %1438 = vset.pattern.permute.xlu0 3
    %1439 = vperm.xlu0 %1438, %v61
    %v1440 = vpop.permute.xlu0 %1439
    %1442 = vset.pattern.permute.xlu0 3
    %1443 = vperm.xlu0 %1442, %v62
    %v1444 = vpop.permute.xlu0 %1443
    %1446 = vset.pattern.permute.xlu0 3
    %1447 = vperm.xlu0 %1446, %v63
    %v1448 = vpop.permute.xlu0 %1447
    %1450 = vset.pattern.permute.xlu0 3
    %1451 = vperm.xlu0 %1450, %v64
    %v1452 = vpop.permute.xlu0 %1451
    %1454 = vset.pattern.permute.xlu0 3
    %1455 = vperm.xlu0 %1454, %v65
    %v1456 = vpop.permute.xlu0 %1455
    %1458 = vset.pattern.permute.xlu0 3
    %1459 = vperm.xlu0 %1458, %v66
    %v1460 = vpop.permute.xlu0 %1459
    %1462 = vset.pattern.permute.xlu0 3
    %1463 = vperm.xlu0 %1462, %v67
    %v1464 = vpop.permute.xlu0 %1463
    %1466 = vset.pattern.permute.xlu0 3
    %1467 = vperm.xlu0 %1466, %v68
    %v1468 = vpop.permute.xlu0 %1467
    %1470 = vset.pattern.permute.xlu0 3
    %1471 = vperm.xlu0 %1470, %v69
    %v1472 = vpop.permute.xlu0 %1471
    %1474 = vset.pattern.permute.xlu0 3
    %1475 = vperm.xlu0 %1474, %v70
    %v1476 = vpop.permute.xlu0 %1475
    %1478 = vset.pattern.permute.xlu0 3
    %1479 = vperm.xlu0 %1478, %v71
    %v1480 = vpop.permute.xlu0 %1479
    %1482 = vset.pattern.permute.xlu0 3
    %1483 = vperm.xlu0 %1482, %v72
    %v1484 = vpop.permute.xlu0 %1483
    %1486 = vset.pattern.permute.xlu0 3
    %1487 = vperm.xlu0 %1486, %v73
    %v1488 = vpop.permute.xlu0 %1487
    %1490 = vset.pattern.permute.xlu0 3
    %1491 = vperm.xlu0 %1490, %v74
    %v1492 = vpop.permute.xlu0 %1491
    %1494 = vset.pattern.permute.xlu0 3
    %1495 = vperm.xlu0 %1494, %v75
    %v1496 = vpop.permute.xlu0 %1495
    %1498 = vset.pattern.permute.xlu0 3
    %1499 = vperm.xlu0 %1498, %v76
    %v1500 = vpop.permute.xlu0 %1499
    %1502 = vset.pattern.permute.xlu0 3
    %1503 = vperm.xlu0 %1502, %v77
    %v1504 = vpop.permute.xlu0 %1503
    %1506 = vset.pattern.permute.xlu0 3
    %1507 = vperm.xlu0 %1506, %v78
    %v1508 = vpop.permute.xlu0 %1507
    %1510 = vset.pattern.permute.xlu0 3
    %1511 = vperm.xlu0 %1510, %v79
    %v1512 = vpop.permute.xlu0 %1511
    %1514 = vset.pattern.permute.xlu0 3
    %1515 = vperm.xlu0 %1514, %v80
    %v1516 = vpop.permute.xlu0 %1515
    %1518 = vset.pattern.permute.xlu0 3
    %1519 = vperm.xlu0 %1518, %v81
    %v1520 = vpop.permute.xlu0 %1519
    %1522 = vset.pattern.permute.xlu0 3
    %1523 = vperm.xlu0 %1522, %v82
    %v1524 = vpop.permute.xlu0 %1523
    %1526 = vset.pattern.permute.xlu0 3
    %1527 = vperm.xlu0 %1526, %v83
    %v1528 = vpop.permute.xlu0 %1527
    %1530 = vset.pattern.permute.xlu0 3
    %1531 = vperm.xlu0 %1530, %v84
    %v1532 = vpop.permute.xlu0 %1531
    %1534 = vset.pattern.permute.xlu0 3
    %1535 = vperm.xlu0 %1534, %v85
    %v1536 = vpop.permute.xlu0 %1535
    %1538 = vset.pattern.permute.xlu0 3
    %1539 = vperm.xlu0 %1538, %v86
    %v1540 = vpop.permute.xlu0 %1539
    %1542 = vset.pattern.permute.xlu0 3
    %1543 = vperm.xlu0 %1542, %v87
    %v1544 = vpop.permute.xlu0 %1543
    %1546 = vset.pattern.permute.xlu0 3
    %1547 = vperm.xlu0 %1546, %v88
    %v1548 = vpop.permute.xlu0 %1547
    %1550 = vset.pattern.permute.xlu0 3
    %1551 = vperm.xlu0 %1550, %v89
    %v1552 = vpop.permute.xlu0 %1551
    %1554 = vset.pattern.permute.xlu0 3
    %1555 = vperm.xlu0 %1554, %v90
    %v1556 = vpop.permute.xlu0 %1555
    %1558 = vset.pattern.permute.xlu0 3
    %1559 = vperm.xlu0 %1558, %v91
    %v1560 = vpop.permute.xlu0 %1559
    %1562 = vset.pattern.permute.xlu0 3
    %1563 = vperm.xlu0 %1562, %v92
    %v1564 = vpop.permute.xlu0 %1563
    %1566 = vset.pattern.permute.xlu0 3
    %1567 = vperm.xlu0 %1566, %v93
    %v1568 = vpop.permute.xlu0 %1567
    %1570 = vset.pattern.permute.xlu0 3
    %1571 = vperm.xlu0 %1570, %v94
    %v1572 = vpop.permute.xlu0 %1571
    %1574 = vset.pattern.permute.xlu0 3
    %1575 = vperm.xlu0 %1574, %v95
    %v1576 = vpop.permute.xlu0 %1575
    %1578 = vset.pattern.permute.xlu0 3
    %1579 = vperm.xlu0 %1578, %v96
    %v1580 = vpop.permute.xlu0 %1579
    %v1582 = vlaneseq
    %v1583 = vshrl.u32 %v1582, 7
    %v1584 = vsub.s32 3, %v1583
    %v1585 = vrot.slane %v97, %v1584
    %v1586 = vmul.f32 %v1328, %v1585
    %v1587 = vmul.f32 %v1332, %v1585
    %v1588 = vmul.f32 %v1336, %v1585
    %v1589 = vmul.f32 %v1340, %v1585
    %v1590 = vmul.f32 %v1344, %v1585
    %v1591 = vmul.f32 %v1348, %v1585
    %v1592 = vmul.f32 %v1352, %v1585
    %v1593 = vmul.f32 %v1356, %v1585
    %v1594 = vmul.f32 %v1360, %v1585
    %v1595 = vmul.f32 %v1364, %v1585
    %v1596 = vmul.f32 %v1368, %v1585
    %v1597 = vmul.f32 %v1372, %v1585
    %v1598 = vmul.f32 %v1376, %v1585
    %v1599 = vmul.f32 %v1380, %v1585
    %v1600 = vmul.f32 %v1384, %v1585
    %v1601 = vmul.f32 %v1388, %v1585
    %v1602 = vmul.f32 %v1392, %v1585
    %v1603 = vmul.f32 %v1396, %v1585
    %v1604 = vmul.f32 %v1400, %v1585
    %v1605 = vmul.f32 %v1404, %v1585
    %v1606 = vmul.f32 %v1408, %v1585
    %v1607 = vmul.f32 %v1412, %v1585
    %v1608 = vmul.f32 %v1416, %v1585
    %v1609 = vmul.f32 %v1420, %v1585
    %v1610 = vmul.f32 %v1424, %v1585
    %v1611 = vmul.f32 %v1428, %v1585
    %v1612 = vmul.f32 %v1432, %v1585
    %v1613 = vmul.f32 %v1436, %v1585
    %v1614 = vmul.f32 %v1440, %v1585
    %v1615 = vmul.f32 %v1444, %v1585
    %v1616 = vmul.f32 %v1448, %v1585
    %v1617 = vmul.f32 %v1452, %v1585
    %v1618 = vmul.f32 %v1456, %v1585
    %v1619 = vmul.f32 %v1460, %v1585
    %v1620 = vmul.f32 %v1464, %v1585
    %v1621 = vmul.f32 %v1468, %v1585
    %v1622 = vmul.f32 %v1472, %v1585
    %v1623 = vmul.f32 %v1476, %v1585
    %v1624 = vmul.f32 %v1480, %v1585
    %v1625 = vmul.f32 %v1484, %v1585
    %v1626 = vmul.f32 %v1488, %v1585
    %v1627 = vmul.f32 %v1492, %v1585
    %v1628 = vmul.f32 %v1496, %v1585
    %v1629 = vmul.f32 %v1500, %v1585
    %v1630 = vmul.f32 %v1504, %v1585
    %v1631 = vmul.f32 %v1508, %v1585
    %v1632 = vmul.f32 %v1512, %v1585
    %v1633 = vmul.f32 %v1516, %v1585
    %v1634 = vmul.f32 %v1520, %v1585
    %v1635 = vmul.f32 %v1524, %v1585
    %v1636 = vmul.f32 %v1528, %v1585
    %v1637 = vmul.f32 %v1532, %v1585
    %v1638 = vmul.f32 %v1536, %v1585
    %v1639 = vmul.f32 %v1540, %v1585
    %v1640 = vmul.f32 %v1544, %v1585
    %v1641 = vmul.f32 %v1548, %v1585
    %v1642 = vmul.f32 %v1552, %v1585
    %v1643 = vmul.f32 %v1556, %v1585
    %v1644 = vmul.f32 %v1560, %v1585
    %v1645 = vmul.f32 %v1564, %v1585
    %v1646 = vmul.f32 %v1568, %v1585
    %v1647 = vmul.f32 %v1572, %v1585
    %v1648 = vmul.f32 %v1576, %v1585
    %v1649 = vmul.f32 %v1580, %v1585
    %v1650 = vadd.f32 %v1262, %v1586
    %v1651 = vadd.f32 %v1263, %v1587
    %v1652 = vadd.f32 %v1264, %v1588
    %v1653 = vadd.f32 %v1265, %v1589
    %v1654 = vadd.f32 %v1266, %v1590
    %v1655 = vadd.f32 %v1267, %v1591
    %v1656 = vadd.f32 %v1268, %v1592
    %v1657 = vadd.f32 %v1269, %v1593
    %v1658 = vadd.f32 %v1270, %v1594
    %v1659 = vadd.f32 %v1271, %v1595
    %v1660 = vadd.f32 %v1272, %v1596
    %v1661 = vadd.f32 %v1273, %v1597
    %v1662 = vadd.f32 %v1274, %v1598
    %v1663 = vadd.f32 %v1275, %v1599
    %v1664 = vadd.f32 %v1276, %v1600
    %v1665 = vadd.f32 %v1277, %v1601
    %v1666 = vadd.f32 %v1278, %v1602
    %v1667 = vadd.f32 %v1279, %v1603
    %v1668 = vadd.f32 %v1280, %v1604
    %v1669 = vadd.f32 %v1281, %v1605
    %v1670 = vadd.f32 %v1282, %v1606
    %v1671 = vadd.f32 %v1283, %v1607
    %v1672 = vadd.f32 %v1284, %v1608
    %v1673 = vadd.f32 %v1285, %v1609
    %v1674 = vadd.f32 %v1286, %v1610
    %v1675 = vadd.f32 %v1287, %v1611
    %v1676 = vadd.f32 %v1288, %v1612
    %v1677 = vadd.f32 %v1289, %v1613
    %v1678 = vadd.f32 %v1290, %v1614
    %v1679 = vadd.f32 %v1291, %v1615
    %v1680 = vadd.f32 %v1292, %v1616
    %v1681 = vadd.f32 %v1293, %v1617
    %v1682 = vadd.f32 %v1294, %v1618
    %v1683 = vadd.f32 %v1295, %v1619
    %v1684 = vadd.f32 %v1296, %v1620
    %v1685 = vadd.f32 %v1297, %v1621
    %v1686 = vadd.f32 %v1298, %v1622
    %v1687 = vadd.f32 %v1299, %v1623
    %v1688 = vadd.f32 %v1300, %v1624
    %v1689 = vadd.f32 %v1301, %v1625
    %v1690 = vadd.f32 %v1302, %v1626
    %v1691 = vadd.f32 %v1303, %v1627
    %v1692 = vadd.f32 %v1304, %v1628
    %v1693 = vadd.f32 %v1305, %v1629
    %v1694 = vadd.f32 %v1306, %v1630
    %v1695 = vadd.f32 %v1307, %v1631
    %v1696 = vadd.f32 %v1308, %v1632
    %v1697 = vadd.f32 %v1309, %v1633
    %v1698 = vadd.f32 %v1310, %v1634
    %v1699 = vadd.f32 %v1311, %v1635
    %v1700 = vadd.f32 %v1312, %v1636
    %v1701 = vadd.f32 %v1313, %v1637
    %v1702 = vadd.f32 %v1314, %v1638
    %v1703 = vadd.f32 %v1315, %v1639
    %v1704 = vadd.f32 %v1316, %v1640
    %v1705 = vadd.f32 %v1317, %v1641
    %v1706 = vadd.f32 %v1318, %v1642
    %v1707 = vadd.f32 %v1319, %v1643
    %v1708 = vadd.f32 %v1320, %v1644
    %v1709 = vadd.f32 %v1321, %v1645
    %v1710 = vadd.f32 %v1322, %v1646
    %v1711 = vadd.f32 %v1323, %v1647
    %v1712 = vadd.f32 %v1324, %v1648
    %v1713 = vadd.f32 %v1325, %v1649
    %v1714 = vld [vmem:[%s2] sm:$0x1]
    %v1716 = vlaneseq
    %v1717 = vshrl.u32 %v1716, 7
    %v1718 = vsub.s32 0, %v1717
    %v1719 = vrot.slane %v1714, %v1718
    %v1721 = vadd.f32 %v1650, %v1719
    %v1722 = vadd.f32 %v1651, %v1719
    %v1723 = vadd.f32 %v1652, %v1719
    %v1724 = vadd.f32 %v1653, %v1719
    %v1725 = vadd.f32 %v1654, %v1719
    %v1726 = vadd.f32 %v1655, %v1719
    %v1727 = vadd.f32 %v1656, %v1719
    %v1728 = vadd.f32 %v1657, %v1719
    %v1729 = vadd.f32 %v1658, %v1719
    %v1730 = vadd.f32 %v1659, %v1719
    %v1731 = vadd.f32 %v1660, %v1719
    %v1732 = vadd.f32 %v1661, %v1719
    %v1733 = vadd.f32 %v1662, %v1719
    %v1734 = vadd.f32 %v1663, %v1719
    %v1735 = vadd.f32 %v1664, %v1719
    %v1736 = vadd.f32 %v1665, %v1719
    %v1737 = vadd.f32 %v1666, %v1719
    %v1738 = vadd.f32 %v1667, %v1719
    %v1739 = vadd.f32 %v1668, %v1719
    %v1740 = vadd.f32 %v1669, %v1719
    %v1741 = vadd.f32 %v1670, %v1719
    %v1742 = vadd.f32 %v1671, %v1719
    %v1743 = vadd.f32 %v1672, %v1719
    %v1744 = vadd.f32 %v1673, %v1719
    %v1745 = vadd.f32 %v1674, %v1719
    %v1746 = vadd.f32 %v1675, %v1719
    %v1747 = vadd.f32 %v1676, %v1719
    %v1748 = vadd.f32 %v1677, %v1719
    %v1749 = vadd.f32 %v1678, %v1719
    %v1750 = vadd.f32 %v1679, %v1719
    %v1751 = vadd.f32 %v1680, %v1719
    %v1752 = vadd.f32 %v1681, %v1719
    %v1753 = vadd.f32 %v1682, %v1719
    %v1754 = vadd.f32 %v1683, %v1719
    %v1755 = vadd.f32 %v1684, %v1719
    %v1756 = vadd.f32 %v1685, %v1719
    %v1757 = vadd.f32 %v1686, %v1719
    %v1758 = vadd.f32 %v1687, %v1719
    %v1759 = vadd.f32 %v1688, %v1719
    %v1760 = vadd.f32 %v1689, %v1719
    %v1761 = vadd.f32 %v1690, %v1719
    %v1762 = vadd.f32 %v1691, %v1719
    %v1763 = vadd.f32 %v1692, %v1719
    %v1764 = vadd.f32 %v1693, %v1719
    %v1765 = vadd.f32 %v1694, %v1719
    %v1766 = vadd.f32 %v1695, %v1719
    %v1767 = vadd.f32 %v1696, %v1719
    %v1768 = vadd.f32 %v1697, %v1719
    %v1769 = vadd.f32 %v1698, %v1719
    %v1770 = vadd.f32 %v1699, %v1719
    %v1771 = vadd.f32 %v1700, %v1719
    %v1772 = vadd.f32 %v1701, %v1719
    %v1773 = vadd.f32 %v1702, %v1719
    %v1774 = vadd.f32 %v1703, %v1719
    %v1775 = vadd.f32 %v1704, %v1719
    %v1776 = vadd.f32 %v1705, %v1719
    %v1777 = vadd.f32 %v1706, %v1719
    %v1778 = vadd.f32 %v1707, %v1719
    %v1779 = vadd.f32 %v1708, %v1719
    %v1780 = vadd.f32 %v1709, %v1719
    %v1781 = vadd.f32 %v1710, %v1719
    %v1782 = vadd.f32 %v1711, %v1719
    %v1783 = vadd.f32 %v1712, %v1719
    %v1784 = vadd.f32 %v1713, %v1719
    %v1785 = vmax.f32 %v1721, 0.0
    %v1786 = vmax.f32 %v1722, 0.0
    %v1787 = vmax.f32 %v1723, 0.0
    %v1788 = vmax.f32 %v1724, 0.0
    %v1789 = vmax.f32 %v1725, 0.0
    %v1790 = vmax.f32 %v1726, 0.0
    %v1791 = vmax.f32 %v1727, 0.0
    %v1792 = vmax.f32 %v1728, 0.0
    %v1793 = vmax.f32 %v1729, 0.0
    %v1794 = vmax.f32 %v1730, 0.0
    %v1795 = vmax.f32 %v1731, 0.0
    %v1796 = vmax.f32 %v1732, 0.0
    %v1797 = vmax.f32 %v1733, 0.0
    %v1798 = vmax.f32 %v1734, 0.0
    %v1799 = vmax.f32 %v1735, 0.0
    %v1800 = vmax.f32 %v1736, 0.0
    %v1801 = vmax.f32 %v1737, 0.0
    %v1802 = vmax.f32 %v1738, 0.0
    %v1803 = vmax.f32 %v1739, 0.0
    %v1804 = vmax.f32 %v1740, 0.0
    %v1805 = vmax.f32 %v1741, 0.0
    %v1806 = vmax.f32 %v1742, 0.0
    %v1807 = vmax.f32 %v1743, 0.0
    %v1808 = vmax.f32 %v1744, 0.0
    %v1809 = vmax.f32 %v1745, 0.0
    %v1810 = vmax.f32 %v1746, 0.0
    %v1811 = vmax.f32 %v1747, 0.0
    %v1812 = vmax.f32 %v1748, 0.0
    %v1813 = vmax.f32 %v1749, 0.0
    %v1814 = vmax.f32 %v1750, 0.0
    %v1815 = vmax.f32 %v1751, 0.0
    %v1816 = vmax.f32 %v1752, 0.0
    %v1817 = vmax.f32 %v1753, 0.0
    %v1818 = vmax.f32 %v1754, 0.0
    %v1819 = vmax.f32 %v1755, 0.0
    %v1820 = vmax.f32 %v1756, 0.0
    %v1821 = vmax.f32 %v1757, 0.0
    %v1822 = vmax.f32 %v1758, 0.0
    %v1823 = vmax.f32 %v1759, 0.0
    %v1824 = vmax.f32 %v1760, 0.0
    %v1825 = vmax.f32 %v1761, 0.0
    %v1826 = vmax.f32 %v1762, 0.0
    %v1827 = vmax.f32 %v1763, 0.0
    %v1828 = vmax.f32 %v1764, 0.0
    %v1829 = vmax.f32 %v1765, 0.0
    %v1830 = vmax.f32 %v1766, 0.0
    %v1831 = vmax.f32 %v1767, 0.0
    %v1832 = vmax.f32 %v1768, 0.0
    %v1833 = vmax.f32 %v1769, 0.0
    %v1834 = vmax.f32 %v1770, 0.0
    %v1835 = vmax.f32 %v1771, 0.0
    %v1836 = vmax.f32 %v1772, 0.0
    %v1837 = vmax.f32 %v1773, 0.0
    %v1838 = vmax.f32 %v1774, 0.0
    %v1839 = vmax.f32 %v1775, 0.0
    %v1840 = vmax.f32 %v1776, 0.0
    %v1841 = vmax.f32 %v1777, 0.0
    %v1842 = vmax.f32 %v1778, 0.0
    %v1843 = vmax.f32 %v1779, 0.0
    %v1844 = vmax.f32 %v1780, 0.0
    %v1845 = vmax.f32 %v1781, 0.0
    %v1846 = vmax.f32 %v1782, 0.0
    %v1847 = vmax.f32 %v1783, 0.0
    %v1848 = vmax.f32 %v1784, 0.0
    %v1849 = vadd.f32 %v1785, %v1786
    %v1850 = vadd.f32 %v1849, %v1787
    %v1851 = vadd.f32 %v1850, %v1788
    %v1852 = vadd.f32 %v1851, %v1789
    %v1853 = vadd.f32 %v1852, %v1790
    %v1854 = vadd.f32 %v1853, %v1791
    %v1855 = vadd.f32 %v1854, %v1792
    %v1856 = vadd.f32 %v1855, %v1793
    %v1857 = vadd.f32 %v1856, %v1794
    %v1858 = vadd.f32 %v1857, %v1795
    %v1859 = vadd.f32 %v1858, %v1796
    %v1860 = vadd.f32 %v1859, %v1797
    %v1861 = vadd.f32 %v1860, %v1798
    %v1862 = vadd.f32 %v1861, %v1799
    %v1863 = vadd.f32 %v1862, %v1800
    %v1864 = vadd.f32 %v1863, %v1801
    %v1865 = vadd.f32 %v1864, %v1802
    %v1866 = vadd.f32 %v1865, %v1803
    %v1867 = vadd.f32 %v1866, %v1804
    %v1868 = vadd.f32 %v1867, %v1805
    %v1869 = vadd.f32 %v1868, %v1806
    %v1870 = vadd.f32 %v1869, %v1807
    %v1871 = vadd.f32 %v1870, %v1808
    %v1872 = vadd.f32 %v1871, %v1809
    %v1873 = vadd.f32 %v1872, %v1810
    %v1874 = vadd.f32 %v1873, %v1811
    %v1875 = vadd.f32 %v1874, %v1812
    %v1876 = vadd.f32 %v1875, %v1813
    %v1877 = vadd.f32 %v1876, %v1814
    %v1878 = vadd.f32 %v1877, %v1815
    %v1879 = vadd.f32 %v1878, %v1816
    %v1880 = vrot.slane %v1879, 4
    %v1881 = vadd.f32 %v1879, %v1880
    %v1882 = vrot.slane %v1881, 2
    %v1883 = vadd.f32 %v1881, %v1882
    %v1884 = vrot.slane %v1883, 1
    %v1885 = vadd.f32 %v1883, %v1884
    %v1886 = vadd.f32 %v1817, %v1818
    %v1887 = vadd.f32 %v1886, %v1819
    %v1888 = vadd.f32 %v1887, %v1820
    %v1889 = vadd.f32 %v1888, %v1821
    %v1890 = vadd.f32 %v1889, %v1822
    %v1891 = vadd.f32 %v1890, %v1823
    %v1892 = vadd.f32 %v1891, %v1824
    %v1893 = vadd.f32 %v1892, %v1825
    %v1894 = vadd.f32 %v1893, %v1826
    %v1895 = vadd.f32 %v1894, %v1827
    %v1896 = vadd.f32 %v1895, %v1828
    %v1897 = vadd.f32 %v1896, %v1829
    %v1898 = vadd.f32 %v1897, %v1830
    %v1899 = vadd.f32 %v1898, %v1831
    %v1900 = vadd.f32 %v1899, %v1832
    %v1901 = vadd.f32 %v1900, %v1833
    %v1902 = vadd.f32 %v1901, %v1834
    %v1903 = vadd.f32 %v1902, %v1835
    %v1904 = vadd.f32 %v1903, %v1836
    %v1905 = vadd.f32 %v1904, %v1837
    %v1906 = vadd.f32 %v1905, %v1838
    %v1907 = vadd.f32 %v1906, %v1839
    %v1908 = vadd.f32 %v1907, %v1840
    %v1909 = vadd.f32 %v1908, %v1841
    %v1910 = vadd.f32 %v1909, %v1842
    %v1911 = vadd.f32 %v1910, %v1843
    %v1912 = vadd.f32 %v1911, %v1844
    %v1913 = vadd.f32 %v1912, %v1845
    %v1914 = vadd.f32 %v1913, %v1846
    %v1915 = vadd.f32 %v1914, %v1847
    %v1916 = vadd.f32 %v1915, %v1848
    %v1917 = vrot.slane %v1916, 4
    %v1918 = vadd.f32 %v1916, %v1917
    %v1919 = vrot.slane %v1918, 2
    %v1920 = vadd.f32 %v1918, %v1919
    %v1921 = vrot.slane %v1920, 1
    %v1922 = vadd.f32 %v1920, %v1921
    %v1923 = vrcp.pop 256.0
    %v1924 = vmul.f32 %v1885, %v1923
    %v1925 = vmul.f32 %v1922, %v1923
    %v1926 = vld [vmem:[%s3] sm:$0xff]
    %v1927 = vld [vmem:[%s3 + $0x8] sm:$0xff]
    %v1928 = vld [vmem:[%s3 + $0x10] sm:$0xff]
    %v1929 = vld [vmem:[%s3 + $0x18] sm:$0xff]
    %v1930 = vld [vmem:[%s3 + $0x20] sm:$0xff]
    %v1931 = vld [vmem:[%s3 + $0x28] sm:$0xff]
    %v1932 = vld [vmem:[%s3 + $0x30] sm:$0xff]
    %v1933 = vld [vmem:[%s3 + $0x38] sm:$0xff]
    %v1934 = vld [vmem:[%s3 + $0x40] sm:$0xff]
    %v1935 = vld [vmem:[%s3 + $0x48] sm:$0xff]
    %v1936 = vld [vmem:[%s3 + $0x50] sm:$0xff]
    %v1937 = vld [vmem:[%s3 + $0x58] sm:$0xff]
    %v1938 = vld [vmem:[%s3 + $0x60] sm:$0xff]
    %v1939 = vld [vmem:[%s3 + $0x68] sm:$0xff]
    %v1940 = vld [vmem:[%s3 + $0x70] sm:$0xff]
    %v1941 = vld [vmem:[%s3 + $0x78] sm:$0xff]
    %v1942 = vld [vmem:[%s4] sm:$0x1]
    %v1944 = vlaneseq
    %v1945 = vshrl.u32 %v1944, 7
    %v1946 = vsub.s32 0, %v1945
    %v1947 = vrot.slane %v1942, %v1946
    %vm1951 = vcmask 1041409
    %v1952 = vsel %vm1951, %v1925, %v1924
    %1954 = vmatprep.subr.mxu0 0.0
    %1955 = vmatpush1.msra.mxu0 %v1926
    %1956 = vmatprep.subr.mxu0 0.0
    %1957 = vmatpush1.msra.mxu0 %v1927
    %1958 = vmatprep.subr.mxu0 0.0
    %1959 = vmatpush1.msra.mxu0 %v1928
    %1960 = vmatprep.subr.mxu0 0.0
    %1961 = vmatpush1.msra.mxu0 %v1929
    %1962 = vmatprep.subr.mxu0 0.0
    %1963 = vmatpush1.msra.mxu0 %v1930
    %1964 = vmatprep.subr.mxu0 0.0
    %1965 = vmatpush1.msra.mxu0 %v1931
    %1966 = vmatprep.subr.mxu0 0.0
    %1967 = vmatpush1.msra.mxu0 %v1932
    %1968 = vmatprep.subr.mxu0 0.0
    %1969 = vmatpush1.msra.mxu0 %v1933
    %1970 = vmatprep.subr.mxu0 0.0
    %1971 = vmatpush1.msra.mxu0 %v1934
    %1972 = vmatprep.subr.mxu0 0.0
    %1973 = vmatpush1.msra.mxu0 %v1935
    %1974 = vmatprep.subr.mxu0 0.0
    %1975 = vmatpush1.msra.mxu0 %v1936
    %1976 = vmatprep.subr.mxu0 0.0
    %1977 = vmatpush1.msra.mxu0 %v1937
    %1978 = vmatprep.subr.mxu0 0.0
    %1979 = vmatpush1.msra.mxu0 %v1938
    %1980 = vmatprep.subr.mxu0 0.0
    %1981 = vmatpush1.msra.mxu0 %v1939
    %1982 = vmatprep.subr.mxu0 0.0
    %1983 = vmatpush1.msra.mxu0 %v1940
    %1984 = vmatprep.subr.mxu0 0.0
    %1985 = vmatpush1.msra.mxu0 %v1941
    %1986 = vmatprep.subr.mxu0 0.0
    %1987 = vmatpush1.msra.mxu0 0.0
    %1988 = vmatprep.subr.mxu0 0.0
    %1989 = vmatpush1.msra.mxu0 0.0
    %1990 = vmatprep.subr.mxu0 0.0
    %1991 = vmatpush1.msra.mxu0 0.0
    %1992 = vmatprep.subr.mxu0 0.0
    %1993 = vmatpush1.msra.mxu0 0.0
    %1994 = vmatprep.subr.mxu0 0.0
    %1995 = vmatpush1.msra.mxu0 0.0
    %1996 = vmatprep.subr.mxu0 0.0
    %1997 = vmatpush1.msra.mxu0 0.0
    %1998 = vmatprep.subr.mxu0 0.0
    %1999 = vmatpush1.msra.mxu0 0.0
    %2000 = vmatprep.subr.mxu0 0.0
    %2001 = vmatpush1.msra.mxu0 0.0
    %2002 = vmatprep.subr.mxu0 0.0
    %2003 = vmatpush1.msra.mxu0 0.0
    %2004 = vmatprep.subr.mxu0 0.0
    %2005 = vmatpush1.msra.mxu0 0.0
    %2006 = vmatprep.subr.mxu0 0.0
    %2007 = vmatpush1.msra.mxu0 0.0
    %2008 = vmatprep.subr.mxu0 0.0
    %2009 = vmatpush1.msra.mxu0 0.0
    %2010 = vmatprep.subr.mxu0 0.0
    %2011 = vmatpush1.msra.mxu0 0.0
    %2012 = vmatprep.subr.mxu0 0.0
    %2013 = vmatpush1.msra.mxu0 0.0
    %2014 = vmatprep.subr.mxu0 0.0
    %2015 = vmatpush1.msra.mxu0 0.0
    %2016 = vmatprep.subr.mxu0 0.0
    %2017 = vmatpush1.msra.mxu0 0.0
    %2018 = vmatprep.mubr.f32.mxu0 0.0
    %2019 = vmatmul.mubr.f32.gmra.mrb[0].mxu0 %v1952
    %v2020 = vpop.f32.mrb[0].mxu0
    %v2021 = vadd.f32 %v1947, %v2020
    %v2022 = vpop.f32.mrb[0].mxu0
    %2023 = vdwg.mxu0
    %v2024 = vmax.f32 %v2021, 0.0
    %v2025 = vld [vmem:[%s5] sm:$0xff]
    %v2026 = vld [vmem:[%s5 + $0x8] sm:$0xff]
    %v2027 = vld [vmem:[%s5 + $0x10] sm:$0xff]
    %v2028 = vld [vmem:[%s5 + $0x18] sm:$0xff]
    %v2029 = vld [vmem:[%s5 + $0x20] sm:$0xff]
    %v2030 = vld [vmem:[%s5 + $0x28] sm:$0xff]
    %v2031 = vld [vmem:[%s5 + $0x30] sm:$0xff]
    %v2032 = vld [vmem:[%s5 + $0x38] sm:$0xff]
    %v2033 = vld [vmem:[%s5 + $0x40] sm:$0xff]
    %v2034 = vld [vmem:[%s5 + $0x48] sm:$0xff]
    %v2035 = vld [vmem:[%s5 + $0x50] sm:$0xff]
    %v2036 = vld [vmem:[%s5 + $0x58] sm:$0xff]
    %v2037 = vld [vmem:[%s5 + $0x60] sm:$0xff]
    %v2038 = vld [vmem:[%s5 + $0x68] sm:$0xff]
    %v2039 = vld [vmem:[%s5 + $0x70] sm:$0xff]
    %v2040 = vld [vmem:[%s5 + $0x78] sm:$0xff]
    %v2041 = vld [vmem:[%s6] sm:$0x1]
    %v2043 = vlaneseq
    %v2044 = vshrl.u32 %v2043, 7
    %v2045 = vsub.s32 0, %v2044
    %v2046 = vrot.slane %v2041, %v2045
    %2048 = vmatprep.subr.mxu0 0.0
    %2049 = vmatpush1.msra.mxu0 %v2025
    %2050 = vmatprep.subr.mxu0 0.0
    %2051 = vmatpush1.msra.mxu0 %v2026
    %2052 = vmatprep.subr.mxu0 0.0
    %2053 = vmatpush1.msra.mxu0 %v2027
    %2054 = vmatprep.subr.mxu0 0.0
    %2055 = vmatpush1.msra.mxu0 %v2028
    %2056 = vmatprep.subr.mxu0 0.0
    %2057 = vmatpush1.msra.mxu0 %v2029
    %2058 = vmatprep.subr.mxu0 0.0
    %2059 = vmatpush1.msra.mxu0 %v2030
    %2060 = vmatprep.subr.mxu0 0.0
    %2061 = vmatpush1.msra.mxu0 %v2031
    %2062 = vmatprep.subr.mxu0 0.0
    %2063 = vmatpush1.msra.mxu0 %v2032
    %2064 = vmatprep.subr.mxu0 0.0
    %2065 = vmatpush1.msra.mxu0 %v2033
    %2066 = vmatprep.subr.mxu0 0.0
    %2067 = vmatpush1.msra.mxu0 %v2034
    %2068 = vmatprep.subr.mxu0 0.0
    %2069 = vmatpush1.msra.mxu0 %v2035
    %2070 = vmatprep.subr.mxu0 0.0
    %2071 = vmatpush1.msra.mxu0 %v2036
    %2072 = vmatprep.subr.mxu0 0.0
    %2073 = vmatpush1.msra.mxu0 %v2037
    %2074 = vmatprep.subr.mxu0 0.0
    %2075 = vmatpush1.msra.mxu0 %v2038
    %2076 = vmatprep.subr.mxu0 0.0
    %2077 = vmatpush1.msra.mxu0 %v2039
    %2078 = vmatprep.subr.mxu0 0.0
    %2079 = vmatpush1.msra.mxu0 %v2040
    %2080 = vmatprep.subr.mxu0 0.0
    %2081 = vmatpush1.msra.mxu0 0.0
    %2082 = vmatprep.subr.mxu0 0.0
    %2083 = vmatpush1.msra.mxu0 0.0
    %2084 = vmatprep.subr.mxu0 0.0
    %2085 = vmatpush1.msra.mxu0 0.0
    %2086 = vmatprep.subr.mxu0 0.0
    %2087 = vmatpush1.msra.mxu0 0.0
    %2088 = vmatprep.subr.mxu0 0.0
    %2089 = vmatpush1.msra.mxu0 0.0
    %2090 = vmatprep.subr.mxu0 0.0
    %2091 = vmatpush1.msra.mxu0 0.0
    %2092 = vmatprep.subr.mxu0 0.0
    %2093 = vmatpush1.msra.mxu0 0.0
    %2094 = vmatprep.subr.mxu0 0.0
    %2095 = vmatpush1.msra.mxu0 0.0
    %2096 = vmatprep.subr.mxu0 0.0
    %2097 = vmatpush1.msra.mxu0 0.0
    %2098 = vmatprep.subr.mxu0 0.0
    %2099 = vmatpush1.msra.mxu0 0.0
    %2100 = vmatprep.subr.mxu0 0.0
    %2101 = vmatpush1.msra.mxu0 0.0
    %2102 = vmatprep.subr.mxu0 0.0
    %2103 = vmatpush1.msra.mxu0 0.0
    %2104 = vmatprep.subr.mxu0 0.0
    %2105 = vmatpush1.msra.mxu0 0.0
    %2106 = vmatprep.subr.mxu0 0.0
    %2107 = vmatpush1.msra.mxu0 0.0
    %2108 = vmatprep.subr.mxu0 0.0
    %2109 = vmatpush1.msra.mxu0 0.0
    %2110 = vmatprep.subr.mxu0 0.0
    %2111 = vmatpush1.msra.mxu0 0.0
    %2112 = vmatprep.mubr.f32.mxu0 0.0
    %2113 = vmatmul.mubr.f32.gmra.mrb[0].mxu0 %v2024
    %v2114 = vpop.f32.mrb[0].mxu0
    %v2115 = vadd.f32 %v2046, %v2114
    %v2116 = vpop.f32.mrb[0].mxu0
    %2117 = vdwg.mxu0
    %v2118 = vmax.f32 %v2115, 0.0
    %v2119 = vld [vmem:[%s7] sm:$0xff]
    %v2120 = vld [vmem:[%s7 + $0x8] sm:$0xff]
    %v2121 = vld [vmem:[%s7 + $0x10] sm:$0xff]
    %v2122 = vld [vmem:[%s7 + $0x18] sm:$0xff]
    %v2123 = vld [vmem:[%s7 + $0x20] sm:$0xff]
    %v2124 = vld [vmem:[%s7 + $0x28] sm:$0xff]
    %v2125 = vld [vmem:[%s7 + $0x30] sm:$0xff]
    %v2126 = vld [vmem:[%s7 + $0x38] sm:$0xff]
    %v2127 = vld [vmem:[%s7 + $0x40] sm:$0xff]
    %v2128 = vld [vmem:[%s7 + $0x48] sm:$0xff]
    %v2129 = vld [vmem:[%s7 + $0x50] sm:$0xff]
    %v2130 = vld [vmem:[%s7 + $0x58] sm:$0xff]
    %v2131 = vld [vmem:[%s7 + $0x60] sm:$0xff]
    %v2132 = vld [vmem:[%s7 + $0x68] sm:$0xff]
    %v2133 = vld [vmem:[%s7 + $0x70] sm:$0xff]
    %v2134 = vld [vmem:[%s7 + $0x78] sm:$0xff]
    %v2135 = vld [vmem:[%s8] sm:$0x1]
    %v2137 = vlaneseq
    %v2138 = vshrl.u32 %v2137, 7
    %v2139 = vsub.s32 0, %v2138
    %v2140 = vrot.slane %v2135, %v2139
    %2142 = vmatprep.subr.mxu0 0.0
    %2143 = vmatpush1.msra.mxu0 %v2119
    %2144 = vmatprep.subr.mxu0 0.0
    %2145 = vmatpush1.msra.mxu0 %v2120
    %2146 = vmatprep.subr.mxu0 0.0
    %2147 = vmatpush1.msra.mxu0 %v2121
    %2148 = vmatprep.subr.mxu0 0.0
    %2149 = vmatpush1.msra.mxu0 %v2122
    %2150 = vmatprep.subr.mxu0 0.0
    %2151 = vmatpush1.msra.mxu0 %v2123
    %2152 = vmatprep.subr.mxu0 0.0
    %2153 = vmatpush1.msra.mxu0 %v2124
    %2154 = vmatprep.subr.mxu0 0.0
    %2155 = vmatpush1.msra.mxu0 %v2125
    %2156 = vmatprep.subr.mxu0 0.0
    %2157 = vmatpush1.msra.mxu0 %v2126
    %2158 = vmatprep.subr.mxu0 0.0
    %2159 = vmatpush1.msra.mxu0 %v2127
    %2160 = vmatprep.subr.mxu0 0.0
    %2161 = vmatpush1.msra.mxu0 %v2128
    %2162 = vmatprep.subr.mxu0 0.0
    %2163 = vmatpush1.msra.mxu0 %v2129
    %2164 = vmatprep.subr.mxu0 0.0
    %2165 = vmatpush1.msra.mxu0 %v2130
    %2166 = vmatprep.subr.mxu0 0.0
    %2167 = vmatpush1.msra.mxu0 %v2131
    %2168 = vmatprep.subr.mxu0 0.0
    %2169 = vmatpush1.msra.mxu0 %v2132
    %2170 = vmatprep.subr.mxu0 0.0
    %2171 = vmatpush1.msra.mxu0 %v2133
    %2172 = vmatprep.subr.mxu0 0.0
    %2173 = vmatpush1.msra.mxu0 %v2134
    %2174 = vmatprep.subr.mxu0 0.0
    %2175 = vmatpush1.msra.mxu0 0.0
    %2176 = vmatprep.subr.mxu0 0.0
    %2177 = vmatpush1.msra.mxu0 0.0
    %2178 = vmatprep.subr.mxu0 0.0
    %2179 = vmatpush1.msra.mxu0 0.0
    %2180 = vmatprep.subr.mxu0 0.0
    %2181 = vmatpush1.msra.mxu0 0.0
    %2182 = vmatprep.subr.mxu0 0.0
    %2183 = vmatpush1.msra.mxu0 0.0
    %2184 = vmatprep.subr.mxu0 0.0
    %2185 = vmatpush1.msra.mxu0 0.0
    %2186 = vmatprep.subr.mxu0 0.0
    %2187 = vmatpush1.msra.mxu0 0.0
    %2188 = vmatprep.subr.mxu0 0.0
    %2189 = vmatpush1.msra.mxu0 0.0
    %2190 = vmatprep.subr.mxu0 0.0
    %2191 = vmatpush1.msra.mxu0 0.0
    %2192 = vmatprep.subr.mxu0 0.0
    %2193 = vmatpush1.msra.mxu0 0.0
    %2194 = vmatprep.subr.mxu0 0.0
    %2195 = vmatpush1.msra.mxu0 0.0
    %2196 = vmatprep.subr.mxu0 0.0
    %2197 = vmatpush1.msra.mxu0 0.0
    %2198 = vmatprep.subr.mxu0 0.0
    %2199 = vmatpush1.msra.mxu0 0.0
    %2200 = vmatprep.subr.mxu0 0.0
    %2201 = vmatpush1.msra.mxu0 0.0
    %2202 = vmatprep.subr.mxu0 0.0
    %2203 = vmatpush1.msra.mxu0 0.0
    %2204 = vmatprep.subr.mxu0 0.0
    %2205 = vmatpush1.msra.mxu0 0.0
    %2206 = vmatprep.mubr.f32.mxu0 0.0
    %2207 = vmatmul.mubr.f32.gmra.mrb[0].mxu0 %v2118
    %v2208 = vpop.f32.mrb[0].mxu0
    %v2209 = vadd.f32 %v2140, %v2208
    %v2210 = vpop.f32.mrb[0].mxu0
    %2211 = vdwg.mxu0
    %v2212 = vtanh.pop %v2209
    %v2213 = vmul.f32 %v2212, 3.1415927
    %2214 = vst [vmem:[#allocation2] sm:$0x3] %v2213
    // Predicated region
    $region38: #{independent_model_forward.1} parent=1 // pred_check
      _
    $region39: #{independent_model_forward.1} parent=1 // pred_check_branch
      %2216 = sbr.rel (0) target = $region41
    $region40: #{independent_model_forward.1} parent=1 // pred_region
      %s2218 = ssub.s32 32, 32
      %2219 = vsyncadd [#allocation3], %s2218
      %s2221 = sshll.u32 [#allocation2], 4
      %s2222 = int_to_ptr.vmem [resolvable:$true] %s2221
      %2224 = dma.vmem_to_hbm [thread:$0]  %s2222, 32, %s9, [#allocation3]
    $region41: #{independent_model_forward.1} parent=1 // pred_fallthru
      _
    // Predicated region
    $region42: #{independent_model_forward.1} parent=1 // pred_check
      _
    $region43: #{independent_model_forward.1} parent=1 // pred_check_branch
      %2226 = sbr.rel (0) target = $region45
    $region44: #{independent_model_forward.1} parent=1 // pred_region
      %2227 = dma.done [#allocation3], 32
    $region45: #{independent_model_forward.1} parent=1 // pred_fallthru
      _
    %2228 = vsyncpa [#allocation3], 1

</llo_original>
